<compile_context>
chip_gen: v5e
topology: v5e:2x2
jax: 0.10.0
libtpu: 0.0.40
codegen_flags: <defaults>
</compile_context>

<pallas_src>
import functools

import jax
import jax.numpy as jnp
from jax import lax
from jax.experimental import pallas as pl
from jax.experimental.pallas import tpu as pltpu

_EPS = 1e-5          # BatchNorm3d default eps
_LANE = 128
_VMEM_LIMIT = 48 * 1024 * 1024   # fits v7x's 64 MiB, above v5e/v6e scoped defaults


def _round_up(n, m):
    return ((n + m - 1) // m) * m


def _pick_tile(n):
    """Largest lane tile that divides n and gives >=2 grid steps (megacore)."""
    for t in (8192, 4096, 2048, 1024, 512, 256, 128):
        if n % t == 0 and n // t >= 2:
            return t
    return n


def _pick_row_tile(r):
    """Row (sublane) tile: multiple of 16, divides r, >=2 grid steps."""
    for t in (256, 128, 64, 32, 16):
        if r % t == 0 and r // t >= 2:
            return t
    return r


# ----------------------------- Pallas kernels ------------------------------ #

def _conv_bn_relu_kernel(xa_ref, xb_ref, w_ref, b_ref, o_ref, *, offs):
    """Fused 3x3x3 conv + folded-BN shift + ReLU for one voxel tile.

    xa_ref/xb_ref: (Cin_p, TN) bf16 -- voxel tiles i and i+1 of the padded,
        flattened, channels-first volume (together they cover the tap halo).
    w_ref: (Cout, 27*Cin_p) bf16  (BN scale folded into the weights)
    b_ref: (Cout, 1)        f32   (folded BN shift)
    o_ref: (Cout, TN)       bf16  (lane-dense, unmasked stores)
    """
    tn = o_ref.shape[1]
    xw = jnp.concatenate([xa_ref[...], xb_ref[...]], axis=1)       # (Cin_p, 2*TN)
    # im2col in VMEM: stack all 27 statically shifted lane windows along the
    # channel (sublane) axis so ONE deep matmul (K = 27*Cin_p) runs the MXU at
    # full systolic depth, with a single accumulator pass.
    xs = jnp.concatenate([xw[:, off:off + tn] for off in offs], axis=0)
    acc = lax.dot_general(w_ref[...], xs, (((1,), (0,)), ((), ())),
                          preferred_element_type=jnp.float32)       # (Cout, TN)
    o_ref[...] = jnp.maximum(acc + b_ref[...], 0.0).astype(o_ref.dtype)


def _maxpool_kernel(x_ref, o_ref, *, wdim):
    """2x2x2 max pool on a flattened-plane layout.

    x_ref: (tR, 2, H*W) -- pairs of consecutive z-planes.
    o_ref: (tR, H*W)    -- o[:, p] = max of the 2x2x2 window whose top-left
    corner is voxel p of the plane; the caller keeps only even-(h, w) p."""
    hw = o_ref.shape[-1]
    lvalid = hw - wdim - 1
    z = jnp.maximum(x_ref[:, 0, :], x_ref[:, 1, :])                       # D
    m = jnp.maximum(
        jnp.maximum(z[:, :lvalid], z[:, 1:lvalid + 1]),                   # W
        jnp.maximum(z[:, wdim:wdim + lvalid], z[:, wdim + 1:wdim + 1 + lvalid]))  # H
    o_ref[:, :lvalid] = m
    o_ref[:, lvalid:] = jnp.zeros((z.shape[0], hw - lvalid), z.dtype)


def _final_softmax_kernel(x_ref, w_ref, b_ref, o_ref):
    """Final 1x1x1 conv (Cout=2, with bias) + 2-class softmax (sigmoid form)."""
    logits = jnp.dot(w_ref[...], x_ref[...],
                     preferred_element_type=jnp.float32) + b_ref[...]   # (2, TN)
    p1 = pl.reciprocal(1.0 + jnp.exp(logits[0:1, :] - logits[1:2, :]),
                       approx=True)            # == softmax(logits, axis=0)[1]
    o_ref[...] = jnp.concatenate([1.0 - p1, p1], axis=0)   # one full-block store


# ----------------------------- Pallas wrappers ------------------------------ #

def conv3x3x3_bn_relu(x, w_flat, shift):
    """x: (Cin, D, H, W); w_flat: (Cout, 27*Cin_p) bf16 (BN scale folded, Cin
    padded to Cin_p); shift: (Cout, 1) f32.  3x3x3 conv, padding=1, stride=1,
    folded BN + ReLU -> (Cout, D, H, W) bf16."""
    cin, d, h, w = x.shape
    cout, kdim = w_flat.shape
    cin_p = kdim // 27
    dp, hp, wp = d + 2, h + 2, w + 2
    hw = hp * wp
    npad = dp * hw
    max_off = 2 * hw + 2 * wp + 2
    # Only compute up to the last valid output voxel (d-1, h-1, w-1): the
    # z-border planes of the padded frame are discarded anyway.
    n_valid = (d - 1) * hw + (h - 1) * wp + w
    tn = max(512, _round_up(max_off, _LANE))      # halo must fit in one tile
    nt = pl.cdiv(n_valid, tn)
    nf = (nt + 1) * tn                            # +1 tile: halo block (spec B)

    # channels-first -> single zero-pad + reshape (no transpose glue)
    xp = jnp.pad(x.astype(jnp.bfloat16),
                 ((0, cin_p - cin), (1, 1), (1, 1), (1, 1)))
    xf = xp.reshape(cin_p, npad)
    xf = jnp.pad(xf, ((0, 0), (0, nf - npad))) if nf >= npad else xf[:, :nf]

    # Tap (dz,dy,dx) of output voxel n reads padded voxel n + offs[t].
    offs = tuple(dz * hw + dy * wp + dx
                 for dz in range(3) for dy in range(3) for dx in range(3))

    of = pl.pallas_call(
        functools.partial(_conv_bn_relu_kernel, offs=offs),
        out_shape=jax.ShapeDtypeStruct((cout, nt * tn), jnp.bfloat16),
        grid=(nt,),
        in_specs=[
            pl.BlockSpec((cin_p, tn), lambda i: (0, i)),       # voxel tile i
            pl.BlockSpec((cin_p, tn), lambda i: (0, i + 1)),   # tile i+1 (halo)
            pl.BlockSpec((cout, kdim), lambda i: (0, 0)),
            pl.BlockSpec((cout, 1), lambda i: (0, 0)),
        ],
        out_specs=pl.BlockSpec((cout, tn), lambda i: (0, i)),
        compiler_params=pltpu.CompilerParams(
            dimension_semantics=("parallel",),
            vmem_limit_bytes=_VMEM_LIMIT),
    )(xf, xf, w_flat, shift)

    no = nt * tn
    of = jnp.pad(of, ((0, 0), (0, npad - no))) if no < npad else of[:, :npad]
    return of.reshape(cout, dp, hp, wp)[:, :d, :h, :w]


def maxpool2(x):
    """2x2x2 max pooling, stride 2.  x: (C, D, H, W) -> (C, D/2, H/2, W/2)."""
    c, d, h, w = x.shape
    d2 = d // 2
    r, hw = c * d2, h * w
    tr = _pick_row_tile(r)
    q = pl.pallas_call(
        functools.partial(_maxpool_kernel, wdim=w),
        out_shape=jax.ShapeDtypeStruct((r, hw), x.dtype),
        grid=(r // tr,),
        in_specs=[pl.BlockSpec((tr, 2, hw), lambda i: (i, 0, 0))],
        out_specs=pl.BlockSpec((tr, hw), lambda i: (i, 0)),
        compiler_params=pltpu.CompilerParams(dimension_semantics=("parallel",)),
    )(x.reshape(r, 2, hw))
    # TODO(synk): this stride-2 subsample is a small output-sized XLA copy; it
    # could be folded into the kernel (or the preceding conv epilogue) entirely.
    return q.reshape(c, d2, h, w)[:, :, ::2, ::2]


def final_conv_softmax(x, w, b):
    """x: (C1, D, H, W) bf16; w: (2, C1) bf16; b: (2, 1) f32 -> (2, D, H, W) f32."""
    c1, d, h, wd = x.shape
    n = d * h * wd
    tn = _pick_tile(n)
    out = pl.pallas_call(
        _final_softmax_kernel,
        out_shape=jax.ShapeDtypeStruct((2, n), jnp.float32),
        grid=(n // tn,),
        in_specs=[
            pl.BlockSpec((c1, tn), lambda i: (0, i)),
            pl.BlockSpec((2, c1), lambda i: (0, 0)),
            pl.BlockSpec((2, 1), lambda i: (0, 0)),
        ],
        out_specs=pl.BlockSpec((2, tn), lambda i: (0, i)),
        compiler_params=pltpu.CompilerParams(dimension_semantics=("parallel",)),
    )(x.reshape(c1, n), w, b)
    return out.reshape(2, d, h, wd)


# ------------------------- parameter construction --------------------------- #

def _pack_conv_weight(w, scale):
    """w: (3,3,3,Cin,Cout) f32, scale: (Cout,) f32 -> (Cout, 27*Cin_p) bf16,
    with the tap/channel ordering matching the kernel's stacked operand."""
    cin, cout = w.shape[3], w.shape[4]
    cin_p = max(16, _round_up(cin, 16))
    wf = (w * scale).reshape(27, cin, cout)
    wf = jnp.pad(wf, ((0, 0), (0, cin_p - cin), (0, 0)))
    return (jnp.transpose(wf, (2, 0, 1))
            .reshape(cout, 27 * cin_p).astype(jnp.bfloat16))


def _init_single_conv(key, cin, cout):
    kw, kg, kb, km, kv = jax.random.split(key, 5)
    fan_in = 27 * cin
    w = jax.random.normal(kw, (3, 3, 3, cin, cout), jnp.float32) / jnp.sqrt(fan_in)
    gamma = 1.0 + 0.1 * jax.random.normal(kg, (cout,), jnp.float32)
    beta = 0.1 * jax.random.normal(kb, (cout,), jnp.float32)
    mean = 0.1 * jax.random.normal(km, (cout,), jnp.float32)
    var = 1.0 + 0.1 * jnp.abs(jax.random.normal(kv, (cout,), jnp.float32))
    scale = gamma / jnp.sqrt(var + _EPS)
    shift = beta - mean * scale
    return {"w": _pack_conv_weight(w, scale),
            "shift": shift.reshape(cout, 1).astype(jnp.float32)}


def _init_double_conv(key, cin, cmid, cout):
    k1, k2 = jax.random.split(key)
    return {"conv1": _init_single_conv(k1, cin, cmid),
            "conv2": _init_single_conv(k2, cmid, cout)}


def init_unet3d_params(key, in_channels=1, out_channels=2, f_maps=(16, 32, 64)):
    keys = jax.random.split(key, len(f_maps) + (len(f_maps) - 1) + 1)
    params = {}
    # Encoders: DoubleConv channel split (conv1: in -> max(out//2, in), conv2 -> out)
    prev = in_channels
    for i, fm in enumerate(f_maps):
        mid = max(fm // 2, prev)
        params[f"enc{i}"] = _init_double_conv(keys[i], prev, mid, fm)
        prev = fm
    # Decoders: concat joining (in = f_maps[i] + f_maps[i+1] of reversed maps)
    rev = list(f_maps)[::-1]
    for i in range(len(rev) - 1):
        cin = rev[i] + rev[i + 1]
        cout = rev[i + 1]
        params[f"dec{i}"] = _init_double_conv(keys[len(f_maps) + i], cin, cout, cout)
    # Final 1x1x1 conv (with bias)
    kf_w, kf_b = jax.random.split(keys[-1])
    params["final_w"] = (jax.random.normal(kf_w, (out_channels, f_maps[0]),
                                           jnp.float32)
                         / jnp.sqrt(f_maps[0])).astype(jnp.bfloat16)
    params["final_b"] = (0.1 * jax.random.normal(kf_b, (out_channels,), jnp.float32)
                         ).reshape(out_channels, 1)
    return params


# ------------------------------ forward pass -------------------------------- #

def _double_conv(x, p):
    x = conv3x3x3_bn_relu(x, p["conv1"]["w"], p["conv1"]["shift"])
    x = conv3x3x3_bn_relu(x, p["conv2"]["w"], p["conv2"]["shift"])
    return x


def _upsample2(x):
    # nearest-neighbour 2x upsampling (InterpolateUpsampling, mode='nearest')
    c, d, h, w = x.shape
    x = jnp.broadcast_to(x[:, :, None, :, None, :, None], (c, d, 2, h, 2, w, 2))
    return x.reshape(c, 2 * d, 2 * h, 2 * w)


def _unet3d_single(x_cdhw, params, num_levels):
    h = x_cdhw.astype(jnp.bfloat16)      # (C, D, H, W), channels-first throughout
    feats = []
    for i in range(num_levels):
        if i > 0:                        # first encoder has no pooling
            h = maxpool2(h)
        h = _double_conv(h, params[f"enc{i}"])
        feats.append(h)
    d = feats[-1]
    for i in range(num_levels - 1):
        skip = feats[num_levels - 2 - i]
        # torch.cat((encoder_features, upsampled_x), dim=1) -> channel axis 0 here
        # TODO(synk): nearest-2x upsample + channel concat are XLA glue; folding
        # them into the decoder conv kernel (split weights + voxel>>1 indexing)
        # would save two HBM round trips per level.
        d = jnp.concatenate([skip, _upsample2(d)], axis=0)
        d = _double_conv(d, params[f"dec{i}"])
    return final_conv_softmax(d, params["final_w"], params["final_b"])  # (2,D,H,W)


def tumseg_forward(x, params, num_levels=3):
    """TumSeg.forward(X): eval-mode UNet3D => per-voxel softmax probabilities.
    x: (N, 1, D, H, W) float32 (NCDHW) -> (N, 2, D, H, W) float32."""
    # TODO(synk): batch is handled with a Python loop (demo batch=1); for N>1
    # fold the batch into the voxel/lane dimension or a leading parallel grid axis.
    return jnp.stack(
        [_unet3d_single(x[b], params, num_levels) for b in range(x.shape[0])])


# ------------------------------ reference / main ----------------------------- #

def _ref_conv_relu(x, w):
    """f32 XLA reference of Conv3d(3x3x3, padding=1) + ReLU for the unit check."""
    y = lax.conv_general_dilated(
        x[None], jnp.transpose(w, (4, 3, 0, 1, 2)),
        window_strides=(1, 1, 1), padding=((1, 1), (1, 1), (1, 1)),
        dimension_numbers=("NCDHW", "OIDHW", "NCDHW"),
        precision=lax.Precision.HIGHEST)[0]
    return jnp.maximum(y, 0.0)


if __name__ == "__main__":
    key = jax.random.PRNGKey(0)
    kx, kp, kc1, kc2, kq = jax.random.split(key, 5)

    # --- unit check: fused tap-stacked conv kernel vs XLA reference ---
    cin, cout, dd = 16, 32, 8
    xt = jax.random.normal(kc1, (cin, dd, dd, dd), jnp.float32).astype(jnp.bfloat16)
    wt = (jax.random.normal(kc2, (3, 3, 3, cin, cout), jnp.float32)
          / jnp.sqrt(27 * cin)).astype(jnp.bfloat16).astype(jnp.float32)
    got = conv3x3x3_bn_relu(
        xt, _pack_conv_weight(wt, jnp.ones((cout,), jnp.float32)),
        jnp.zeros((cout, 1), jnp.float32)).astype(jnp.float32)
    ref = _ref_conv_relu(xt.astype(jnp.float32), wt)
    assert bool(jnp.allclose(got, ref, atol=3e-2)), float(jnp.max(jnp.abs(got - ref)))

    # --- unit check: max-pool kernel vs reshape-max reference (exact) ---
    xq = jax.random.normal(kq, (16, 8, 8, 8), jnp.float32).astype(jnp.bfloat16)
    pref = xq.reshape(16, 4, 2, 4, 2, 4, 2).max(axis=(2, 4, 6))
    assert bool(jnp.array_equal(maxpool2(xq), pref))

    # --- full forward: small synthetic CT volume, NCDHW (batch=1, 1 ch, 16^3) ---
    x = jax.random.normal(kx, (1, 1, 16, 16, 16), jnp.float32)
    params = init_unet3d_params(kp, in_channels=1, out_channels=2,
                                f_maps=(16, 32, 64))

    fwd = jax.jit(functools.partial(tumseg_forward, num_levels=3))
    out = jax.block_until_ready(fwd(x, params))

    assert out.shape == (1, 2, 16, 16, 16), out.shape
    assert out.dtype == jnp.float32
    assert bool(jnp.all(jnp.isfinite(out)))
    # softmax over the channel dim must sum to 1
    assert bool(jnp.allclose(out.sum(axis=1), 1.0, atol=1e-5))
    print("KERNEL_OK")
</pallas_src>

<mosaic_0001>
module attributes {stable_mosaic.version = 11 : i64} {
  func.func @_conv_bn_relu_kernel(%arg0: i32, %arg1: memref<16x512xbf16, #tpu.memory_space<vmem>>, %arg2: memref<16x512xbf16, #tpu.memory_space<vmem>>, %arg3: memref<32x432xbf16, #tpu.memory_space<vmem>>, %arg4: memref<32x1xf32, #tpu.memory_space<vmem>>, %arg5: memref<32x512xbf16, #tpu.memory_space<vmem>>) attributes {dimension_semantics = [#tpu.dimension_semantics<parallel>], iteration_bounds = array<i64: 2>, scalar_prefetch = 0 : i64, scratch_operands = 0 : i64, tpu.core_type = #tpu.core_type<tc>, window_params = [{transform_indices = @transform_0, window_bounds = array<i64: 16, 512>}, {transform_indices = @transform_1, window_bounds = array<i64: 16, 512>}, {pipeline_mode = #tpu.pipeline_mode<synchronous>, transform_indices = @transform_2, window_bounds = array<i64: 32, 432>}, {pipeline_mode = #tpu.pipeline_mode<synchronous>, transform_indices = @transform_3, window_bounds = array<i64: 32, 1>}, {transform_indices = @transform_4, window_bounds = array<i64: 32, 512>}]} {
    %c0 = arith.constant 0 : index
    %c0_0 = arith.constant 0 : index
    %0 = vector.load %arg1[%c0, %c0_0] : memref<16x512xbf16, #tpu.memory_space<vmem>>, vector<16x512xbf16>
    %c0_1 = arith.constant 0 : index
    %c0_2 = arith.constant 0 : index
    %1 = vector.load %arg2[%c0_1, %c0_2] : memref<16x512xbf16, #tpu.memory_space<vmem>>, vector<16x512xbf16>
    %2 = tpu.concatenate %0, %1 in 1 : vector<16x512xbf16>, vector<16x512xbf16> -> vector<16x1024xbf16>
    %3 = vector.extract_strided_slice %2 {offsets = [0, 0], sizes = [16, 512], strides = [1, 1]} : vector<16x1024xbf16> to vector<16x512xbf16>
    %4 = vector.extract_strided_slice %2 {offsets = [0, 1], sizes = [16, 512], strides = [1, 1]} : vector<16x1024xbf16> to vector<16x512xbf16>
    %5 = vector.extract_strided_slice %2 {offsets = [0, 2], sizes = [16, 512], strides = [1, 1]} : vector<16x1024xbf16> to vector<16x512xbf16>
    %6 = vector.extract_strided_slice %2 {offsets = [0, 10], sizes = [16, 512], strides = [1, 1]} : vector<16x1024xbf16> to vector<16x512xbf16>
    %7 = vector.extract_strided_slice %2 {offsets = [0, 11], sizes = [16, 512], strides = [1, 1]} : vector<16x1024xbf16> to vector<16x512xbf16>
    %8 = vector.extract_strided_slice %2 {offsets = [0, 12], sizes = [16, 512], strides = [1, 1]} : vector<16x1024xbf16> to vector<16x512xbf16>
    %9 = vector.extract_strided_slice %2 {offsets = [0, 20], sizes = [16, 512], strides = [1, 1]} : vector<16x1024xbf16> to vector<16x512xbf16>
    %10 = vector.extract_strided_slice %2 {offsets = [0, 21], sizes = [16, 512], strides = [1, 1]} : vector<16x1024xbf16> to vector<16x512xbf16>
    %11 = vector.extract_strided_slice %2 {offsets = [0, 22], sizes = [16, 512], strides = [1, 1]} : vector<16x1024xbf16> to vector<16x512xbf16>
    %12 = vector.extract_strided_slice %2 {offsets = [0, 100], sizes = [16, 512], strides = [1, 1]} : vector<16x1024xbf16> to vector<16x512xbf16>
    %13 = vector.extract_strided_slice %2 {offsets = [0, 101], sizes = [16, 512], strides = [1, 1]} : vector<16x1024xbf16> to vector<16x512xbf16>
    %14 = vector.extract_strided_slice %2 {offsets = [0, 102], sizes = [16, 512], strides = [1, 1]} : vector<16x1024xbf16> to vector<16x512xbf16>
    %15 = vector.extract_strided_slice %2 {offsets = [0, 110], sizes = [16, 512], strides = [1, 1]} : vector<16x1024xbf16> to vector<16x512xbf16>
    %16 = vector.extract_strided_slice %2 {offsets = [0, 111], sizes = [16, 512], strides = [1, 1]} : vector<16x1024xbf16> to vector<16x512xbf16>
    %17 = vector.extract_strided_slice %2 {offsets = [0, 112], sizes = [16, 512], strides = [1, 1]} : vector<16x1024xbf16> to vector<16x512xbf16>
    %18 = vector.extract_strided_slice %2 {offsets = [0, 120], sizes = [16, 512], strides = [1, 1]} : vector<16x1024xbf16> to vector<16x512xbf16>
    %19 = vector.extract_strided_slice %2 {offsets = [0, 121], sizes = [16, 512], strides = [1, 1]} : vector<16x1024xbf16> to vector<16x512xbf16>
    %20 = vector.extract_strided_slice %2 {offsets = [0, 122], sizes = [16, 512], strides = [1, 1]} : vector<16x1024xbf16> to vector<16x512xbf16>
    %21 = vector.extract_strided_slice %2 {offsets = [0, 200], sizes = [16, 512], strides = [1, 1]} : vector<16x1024xbf16> to vector<16x512xbf16>
    %22 = vector.extract_strided_slice %2 {offsets = [0, 201], sizes = [16, 512], strides = [1, 1]} : vector<16x1024xbf16> to vector<16x512xbf16>
    %23 = vector.extract_strided_slice %2 {offsets = [0, 202], sizes = [16, 512], strides = [1, 1]} : vector<16x1024xbf16> to vector<16x512xbf16>
    %24 = vector.extract_strided_slice %2 {offsets = [0, 210], sizes = [16, 512], strides = [1, 1]} : vector<16x1024xbf16> to vector<16x512xbf16>
    %25 = vector.extract_strided_slice %2 {offsets = [0, 211], sizes = [16, 512], strides = [1, 1]} : vector<16x1024xbf16> to vector<16x512xbf16>
    %26 = vector.extract_strided_slice %2 {offsets = [0, 212], sizes = [16, 512], strides = [1, 1]} : vector<16x1024xbf16> to vector<16x512xbf16>
    %27 = vector.extract_strided_slice %2 {offsets = [0, 220], sizes = [16, 512], strides = [1, 1]} : vector<16x1024xbf16> to vector<16x512xbf16>
    %28 = vector.extract_strided_slice %2 {offsets = [0, 221], sizes = [16, 512], strides = [1, 1]} : vector<16x1024xbf16> to vector<16x512xbf16>
    %29 = vector.extract_strided_slice %2 {offsets = [0, 222], sizes = [16, 512], strides = [1, 1]} : vector<16x1024xbf16> to vector<16x512xbf16>
    %30 = tpu.concatenate %3, %4, %5, %6, %7, %8, %9, %10, %11, %12, %13, %14, %15, %16, %17, %18 in 0 : vector<16x512xbf16>, vector<16x512xbf16>, vector<16x512xbf16>, vector<16x512xbf16>, vector<16x512xbf16>, vector<16x512xbf16>, vector<16x512xbf16>, vector<16x512xbf16>, vector<16x512xbf16>, vector<16x512xbf16>, vector<16x512xbf16>, vector<16x512xbf16>, vector<16x512xbf16>, vector<16x512xbf16>, vector<16x512xbf16>, vector<16x512xbf16> -> vector<256x512xbf16>
    %31 = tpu.concatenate %19, %20, %21, %22, %23, %24, %25, %26, %27, %28, %29 in 0 : vector<16x512xbf16>, vector<16x512xbf16>, vector<16x512xbf16>, vector<16x512xbf16>, vector<16x512xbf16>, vector<16x512xbf16>, vector<16x512xbf16>, vector<16x512xbf16>, vector<16x512xbf16>, vector<16x512xbf16>, vector<16x512xbf16> -> vector<176x512xbf16>
    %32 = tpu.concatenate %30, %31 in 0 : vector<256x512xbf16>, vector<176x512xbf16> -> vector<432x512xbf16>
    %c0_3 = arith.constant 0 : index
    %c0_4 = arith.constant 0 : index
    %33 = vector.load %arg3[%c0_3, %c0_4] : memref<32x432xbf16, #tpu.memory_space<vmem>>, vector<32x432xbf16>
    %cst = arith.constant dense<0.000000e+00> : vector<32x512xf32>
    %34 = tpu.matmul %33, %32, %cst {dimension_numbers = #tpu.dot_dimension_numbers<[1], [0], [0], [1], [0, 0, 1, 1], [], []>} : vector<32x432xbf16>, vector<432x512xbf16>, vector<32x512xf32> -> vector<32x512xf32>
    %c0_5 = arith.constant 0 : index
    %c0_6 = arith.constant 0 : index
    %35 = vector.load %arg4[%c0_5, %c0_6] : memref<32x1xf32, #tpu.memory_space<vmem>>, vector<32x1xf32>
    %36 = vector.broadcast %35 : vector<32x1xf32> to vector<32x512xf32>
    %37 = arith.addf %34, %36 : vector<32x512xf32>
    %cst_7 = arith.constant 0.000000e+00 : f32
    %38 = vector.broadcast %cst_7 : f32 to vector<32x512xf32>
    %39 = arith.maximumf %37, %38 : vector<32x512xf32>
    %40 = arith.truncf %39 : vector<32x512xf32> to vector<32x512xbf16>
    %c0_8 = arith.constant 0 : index
    %c0_9 = arith.constant 0 : index
    %41 = vector.load %arg5[%c0_8, %c0_9] : memref<32x512xbf16, #tpu.memory_space<vmem>>, vector<32x512xbf16>
    tpu.vector_store %arg5[%c0_8, %c0_9], %40 {strides = array<i32>} : memref<32x512xbf16, #tpu.memory_space<vmem>>, vector<32x512xbf16>,
    return
  }
  func.func @transform_0(%arg0: i32) -> (i32, i32) {
    %c0_i32 = arith.constant 0 : i32
    %c0_i32_0 = arith.constant 0 : i32
    return %c0_i32, %arg0 : i32, i32
  }
  func.func @transform_1(%arg0: i32) -> (i32, i32) {
    %c1_i32 = arith.constant 1 : i32
    %0 = arith.addi %arg0, %c1_i32 : i32
    %c0_i32 = arith.constant 0 : i32
    %c0_i32_0 = arith.constant 0 : i32
    return %c0_i32, %0 : i32, i32
  }
  func.func @transform_2(%arg0: i32) -> (i32, i32) {
    %c0_i32 = arith.constant 0 : i32
    %c0_i32_0 = arith.constant 0 : i32
    %c0_i32_1 = arith.constant 0 : i32
    return %c0_i32, %c0_i32_0 : i32, i32
  }
  func.func @transform_3(%arg0: i32) -> (i32, i32) {
    %c0_i32 = arith.constant 0 : i32
    %c0_i32_0 = arith.constant 0 : i32
    %c0_i32_1 = arith.constant 0 : i32
    return %c0_i32, %c0_i32_0 : i32, i32
  }
  func.func @transform_4(%arg0: i32) -> (i32, i32) {
    %c0_i32 = arith.constant 0 : i32
    %c0_i32_0 = arith.constant 0 : i32
    return %c0_i32, %arg0 : i32, i32
  }
}

</mosaic_0001>

<llo_original>
// kernel: tpu_custom_call.1
$region0: #{tpu_custom_call.1}
  #allocation0 [shape = 'u32[]', space=smem, size = 0x4, offset = 0x4, fixed_abs, tag = 'smem constant byte address 0x4 - core index']
  #allocation1 [shape = 'u32[72,128]{1,0:T(1,128)}', space=vmem, size = 0x9000, scoped, tag = 'internal scratch']
  %s0 = inlined_call_operand.hbm [shape: bf16[16,1536], index: 0, kind: input, shape index: {}]
  %s1 = inlined_call_operand.hbm [shape: bf16[16,1536], index: 1, kind: input, shape index: {}]
  %s2 = inlined_call_operand.hbm [shape: bf16[32,432], index: 2, kind: input, shape index: {}]
  %s3 = inlined_call_operand.vmem [shape: f32[32,1], index: 3, kind: input, shape index: {}]
  %s4 = inlined_call_operand.hbm [shape: bf16[32,1024], index: 4, kind: output, shape index: {}]
  %s5 = sld [smem:[#allocation0]]
  $region61: #{tpu_custom_call.1} parent=0
    _
  %s7 = ssub.s32 1, %s5
  %s8 = scalar_select 0, %s7, %s5
  $region1: #{tpu_custom_call.1} parent=0
    #allocation2 [shape = 'u8[32768]{0}', space=vmem, size = 0x8000, scoped, tag = 'input window, operand 0']
    #allocation3 [shape = 's32[2]{0}', space=sflag, size = 0x8, scoped, tag = 'scoped memory for tpu_custom_call.1']
    #allocation4 [shape = 's32[2]{0}', space=sflag, size = 0x8, scoped, tag = 'scoped memory for tpu_custom_call.1']
    #allocation5 [shape = 'u8[32768]{0}', space=vmem, size = 0x8000, scoped, tag = 'input window, operand 1']
    #allocation6 [shape = 's32[2]{0}', space=sflag, size = 0x8, scoped, tag = 'scoped memory for tpu_custom_call.1']
    #allocation7 [shape = 'u8[32768]{0}', space=vmem, size = 0x8000, scoped, tag = 'input window, operand 2, single buffered']
    #allocation8 [shape = 'u8[65536]{0}', space=vmem, size = 0x10000, scoped, tag = 'output window, operand 0']
    %9 = vsyncpa [#allocation3], 0
    %s10 = scalar_lea.sflag [#allocation3], 1
    %11 = vsyncpa %s10, 0
    %12 = vsyncpa [#allocation6], 0
    %s13 = scalar_lea.sflag [#allocation6], 1
    %14 = vsyncpa %s13, 0
    %15 = vsyncpa [#allocation4], 0
    %s16 = scalar_lea.sflag [#allocation4], 1
    %17 = vsyncpa %s16, 0
    loop: start=0, step=1, limit=4
    $region2: #{tpu_custom_call.1} parent=1 // loop_pre_header
      _
    $region3: #{tpu_custom_call.1} parent=1 // loop_header
      %s19 = sphi 0, %s23
      %p20 = scmp.ge.s32.totalorder %s19, 4
      %s29 = sphi 0, %s31
      %s32 = sphi 0, %s29
      %s33 = sphi 0, %s32
      %s49 = sphi 0, %s33
      %s57 = sphi 0, %s59
      %s60 = sphi 0, %s57
      %s61 = sphi 0, %s60
      %s77 = sphi 0, %s61
      %s81 = sphi 0, %s81
      %s83 = sphi 0, %s81
      %s84 = sphi 0, %s83
      %s98 = sphi 0, %s84
      %s102 = sphi 0, %s102
      %s104 = sphi 0, %s102
      %s105 = sphi 0, %s104
      %s119 = sphi 0, %s105
      %s125 = sphi 0, %s127
      %s128 = sphi 0, %s125
      %s129 = sphi 0, %s128
      %s145 = sphi 0, %s129
    $region4: #{tpu_custom_call.1} parent=1 // loop_header_branch
      %22 = sbr.rel (%p20) target = $region8
    $region5: #{tpu_custom_call.1} parent=1 // loop_body
      %s24 = ssub.s32 %s19, 1
      %s25 = ssub.s32 %s19, 2
      %s26 = sadd.s32 %s19, 1
      %s27 = ssub.s32 %s19, %s26
      %p28 = scmp.eq.s32.totalorder %s27, 0
      %s30 = sadd.s32 %s29, 1
      %s31 = scalar_select %p28, %s29, %s30
      %p34 = pneg %p28
      %p35 = scmp.eq.s32.totalorder %s19, 1
      %p36 = por %p34, %p35
      %p37 = scmp.ne.s32.totalorder %s29, %s32
      %p38 = scmp.eq.s32.totalorder %s19, 0
      %p39 = por %p37, %p38
      %p40 = scmp.ne.s32.totalorder %s29, %s32
      %p41 = scmp.eq.s32.totalorder %s24, 1
      %p42 = por %p40, %p41
      %p43 = scmp.ne.s32.totalorder %s32, %s33
      %p44 = scmp.eq.s32.totalorder %s24, 0
      %p45 = por %p43, %p44
      %p46 = scmp.ne.s32.totalorder %s32, %s33
      %p47 = scmp.eq.s32.totalorder %s25, 1
      %p48 = por %p46, %p47
      %p50 = scmp.ne.s32.totalorder %s33, %s49
      %p51 = scmp.eq.s32.totalorder %s25, 0
      %p52 = por %p50, %p51
      %s53 = sadd.s32 %s19, 1
      %s54 = sadd.s32 %s26, 1
      %s55 = ssub.s32 %s53, %s54
      %p56 = scmp.eq.s32.totalorder %s55, 0
      %s58 = sadd.s32 %s57, 1
      %s59 = scalar_select %p56, %s57, %s58
      %p62 = pneg %p56
      %p63 = scmp.eq.s32.totalorder %s19, 1
      %p64 = por %p62, %p63
      %p65 = scmp.ne.s32.totalorder %s57, %s60
      %p66 = scmp.eq.s32.totalorder %s19, 0
      %p67 = por %p65, %p66
      %p68 = scmp.ne.s32.totalorder %s57, %s60
      %p69 = scmp.eq.s32.totalorder %s24, 1
      %p70 = por %p68, %p69
      %p71 = scmp.ne.s32.totalorder %s60, %s61
      %p72 = scmp.eq.s32.totalorder %s24, 0
      %p73 = por %p71, %p72
      %p74 = scmp.ne.s32.totalorder %s60, %s61
      %p75 = scmp.eq.s32.totalorder %s25, 1
      %p76 = por %p74, %p75
      %p78 = scmp.ne.s32.totalorder %s61, %s77
      %p79 = scmp.eq.s32.totalorder %s25, 0
      %p80 = por %p78, %p79
      %s82 = sadd.s32 %s81, 1
      %p85 = scmp.eq.s32.totalorder %s19, 1
      %p86 = scmp.ne.s32.totalorder %s81, %s83
      %p87 = scmp.eq.s32.totalorder %s19, 0
      %p88 = por %p86, %p87
      %p89 = scmp.ne.s32.totalorder %s81, %s83
      %p90 = scmp.eq.s32.totalorder %s24, 1
      %p91 = por %p89, %p90
      %p92 = scmp.ne.s32.totalorder %s83, %s84
      %p93 = scmp.eq.s32.totalorder %s24, 0
      %p94 = por %p92, %p93
      %p95 = scmp.ne.s32.totalorder %s83, %s84
      %p96 = scmp.eq.s32.totalorder %s25, 1
      %p97 = por %p95, %p96
      %p99 = scmp.ne.s32.totalorder %s84, %s98
      %p100 = scmp.eq.s32.totalorder %s25, 0
      %p101 = por %p99, %p100
      %s103 = sadd.s32 %s102, 1
      %p106 = scmp.eq.s32.totalorder %s19, 1
      %p107 = scmp.ne.s32.totalorder %s102, %s104
      %p108 = scmp.eq.s32.totalorder %s19, 0
      %p109 = por %p107, %p108
      %p110 = scmp.ne.s32.totalorder %s102, %s104
      %p111 = scmp.eq.s32.totalorder %s24, 1
      %p112 = por %p110, %p111
      %p113 = scmp.ne.s32.totalorder %s104, %s105
      %p114 = scmp.eq.s32.totalorder %s24, 0
      %p115 = por %p113, %p114
      %p116 = scmp.ne.s32.totalorder %s104, %s105
      %p117 = scmp.eq.s32.totalorder %s25, 1
      %p118 = por %p116, %p117
      %p120 = scmp.ne.s32.totalorder %s105, %s119
      %p121 = scmp.eq.s32.totalorder %s25, 0
      %p122 = por %p120, %p121
      %s123 = ssub.s32 %s19, %s26
      %p124 = scmp.eq.s32.totalorder %s123, 0
      %s126 = sadd.s32 %s125, 1
      %s127 = scalar_select %p124, %s125, %s126
      %p130 = pneg %p124
      %p131 = scmp.eq.s32.totalorder %s19, 1
      %p132 = por %p130, %p131
      %p133 = scmp.ne.s32.totalorder %s125, %s128
      %p134 = scmp.eq.s32.totalorder %s19, 0
      %p135 = por %p133, %p134
      %p136 = scmp.ne.s32.totalorder %s125, %s128
      %p137 = scmp.eq.s32.totalorder %s24, 1
      %p138 = por %p136, %p137
      %p139 = scmp.ne.s32.totalorder %s128, %s129
      %p140 = scmp.eq.s32.totalorder %s24, 0
      %p141 = por %p139, %p140
      %p142 = scmp.ne.s32.totalorder %s128, %s129
      %p143 = scmp.eq.s32.totalorder %s25, 1
      %p144 = por %p142, %p143
      %p146 = scmp.ne.s32.totalorder %s129, %s145
      %p147 = scmp.eq.s32.totalorder %s25, 0
      %p148 = por %p146, %p147
      %p149 = scmp.le.s32.totalorder 1, %s19
      %p150 = scmp.lt.s32.totalorder %s19, 3
      %p151 = pnand %p149, %p150
      %p152 = pneg %p151
      // Predicated region
      $region9: #{tpu_custom_call.1} parent=5 // pred_check
        _
      $region10: #{tpu_custom_call.1} parent=5 // pred_check_branch
        %154 = sbr.rel (%p151) target = $region12
      $region11: #{tpu_custom_call.1} parent=5 // pred_region
        %s155 = ssub.s32 %s19, 1
        // Predicated region
        $region13: #{tpu_custom_call.1} parent=11 // pred_check
          %p156 = pneg %p94
        $region14: #{tpu_custom_call.1} parent=11 // pred_check_branch
          %158 = sbr.rel (%p156) target = $region16
        $region15: #{tpu_custom_call.1} parent=11 // pred_region
          %160 = vsyncadd [#allocation6], 0
          %s161 = sshll.u32 %s2, 4
          %s162 = int_to_ptr.hbm [resolvable:$true] %s161
          %s163 = sshll.u32 [#allocation7], 4
          %s164 = int_to_ptr.vmem [resolvable:$true] %s163
          %169 = dma.hbm_to_vmem [thread:$0]  %s162, 1024, %s164, [#allocation6], 256, 256, 16
        $region16: #{tpu_custom_call.1} parent=11 // pred_fallthru
          _
        // Predicated region
        $region17: #{tpu_custom_call.1} parent=11 // pred_check
          %p170 = pneg %p115
        $region18: #{tpu_custom_call.1} parent=11 // pred_check_branch
          %172 = sbr.rel (%p170) target = $region20
        $region19: #{tpu_custom_call.1} parent=11 // pred_region
          _
        $region20: #{tpu_custom_call.1} parent=11 // pred_fallthru
          _
      $region12: #{tpu_custom_call.1} parent=5 // pred_fallthru
        _
      %p173 = scmp.lt.s32.totalorder %s19, 2
      // Predicated region
      $region21: #{tpu_custom_call.1} parent=5 // pred_check
        %p174 = pneg %p173
      $region22: #{tpu_custom_call.1} parent=5 // pred_check_branch
        %176 = sbr.rel (%p174) target = $region24
      $region23: #{tpu_custom_call.1} parent=5 // pred_region
        // Predicated region
        $region25: #{tpu_custom_call.1} parent=23 // pred_check
          %p177 = pneg %p39
        $region26: #{tpu_custom_call.1} parent=23 // pred_check_branch
          %179 = sbr.rel (%p177) target = $region28
        $region27: #{tpu_custom_call.1} parent=23 // pred_region
          %s180 = sand.u32 %s29, 1
          %s181 = scalar_lea.sflag [#allocation3], %s180
          %s182 = sand.u32 %s29, 1
          %s183 = smul.addr %s182, 32
          %s184 = scalar_lea.vmem [#allocation2], %s183
          %s185 = smul.u32 4, %s19
          %187 = vsyncadd %s181, 0
          %s188 = smul.addr %s185, 4
          %s189 = scalar_lea.hbm %s0, %s188
          %s190 = sshll.u32 %s189, 4
          %s191 = int_to_ptr.hbm [resolvable:$true] %s190
          %s192 = sshll.u32 %s184, 4
          %s193 = int_to_ptr.vmem [resolvable:$true] %s192
          %198 = dma.hbm_to_vmem [thread:$0]  %s191, 512, %s193, %s181, 768, 256, 16
        $region28: #{tpu_custom_call.1} parent=23 // pred_fallthru
          _
        // Predicated region
        $region29: #{tpu_custom_call.1} parent=23 // pred_check
          %p199 = pneg %p67
        $region30: #{tpu_custom_call.1} parent=23 // pred_check_branch
          %201 = sbr.rel (%p199) target = $region32
        $region31: #{tpu_custom_call.1} parent=23 // pred_region
          %s202 = sand.u32 %s19, 1
          %s203 = scalar_lea.sflag [#allocation6], %s202
          %s204 = sand.u32 %s57, 1
          %s205 = smul.addr %s204, 32
          %s206 = scalar_lea.vmem [#allocation5], %s205
          %s207 = sadd.s32 %s19, 1
          %s208 = smul.u32 4, %s207
          %210 = vsyncadd %s203, 0
          %s211 = smul.addr %s208, 4
          %s212 = scalar_lea.hbm %s1, %s211
          %s213 = sshll.u32 %s212, 4
          %s214 = int_to_ptr.hbm [resolvable:$true] %s213
          %s215 = sshll.u32 %s206, 4
          %s216 = int_to_ptr.vmem [resolvable:$true] %s215
          %221 = dma.hbm_to_vmem [thread:$0]  %s214, 512, %s216, %s203, 768, 256, 16
        $region32: #{tpu_custom_call.1} parent=23 // pred_fallthru
          _
      $region24: #{tpu_custom_call.1} parent=5 // pred_fallthru
        _
      %p222 = scmp.le.s32.totalorder 1, %s19
      %p223 = scmp.lt.s32.totalorder %s19, 3
      %p224 = pnand %p222, %p223
      %p225 = pneg %p224
      // Predicated region
      $region33: #{tpu_custom_call.1} parent=5 // pred_check
        _
      $region34: #{tpu_custom_call.1} parent=5 // pred_check_branch
        %227 = sbr.rel (%p224) target = $region36
      $region35: #{tpu_custom_call.1} parent=5 // pred_region
        %s228 = ssub.s32 %s19, 1
        %s229 = sand.u32 %s32, 1
        %s230 = scalar_lea.sflag [#allocation3], %s229
        %s231 = sand.u32 %s32, 1
        %s232 = smul.addr %s231, 32
        %s233 = scalar_lea.vmem [#allocation2], %s232
        // Predicated region
        $region37: #{tpu_custom_call.1} parent=35 // pred_check
          %p234 = pneg %p45
        $region38: #{tpu_custom_call.1} parent=35 // pred_check_branch
          %236 = sbr.rel (%p234) target = $region40
        $region39: #{tpu_custom_call.1} parent=35 // pred_region
          %238 = dma.done %s230, 512
        $region40: #{tpu_custom_call.1} parent=35 // pred_fallthru
          _
        %s239 = sand.u32 %s24, 1
        %s240 = scalar_lea.sflag [#allocation6], %s239
        %s241 = sand.u32 %s60, 1
        %s242 = smul.addr %s241, 32
        %s243 = scalar_lea.vmem [#allocation5], %s242
        // Predicated region
        $region41: #{tpu_custom_call.1} parent=35 // pred_check
          %p244 = pneg %p73
        $region42: #{tpu_custom_call.1} parent=35 // pred_check_branch
          %246 = sbr.rel (%p244) target = $region44
        $region43: #{tpu_custom_call.1} parent=35 // pred_region
          %248 = dma.done %s240, 512
        $region44: #{tpu_custom_call.1} parent=35 // pred_fallthru
          _
        // Predicated region
        $region45: #{tpu_custom_call.1} parent=35 // pred_check
          %p249 = pneg %p94
        $region46: #{tpu_custom_call.1} parent=35 // pred_check_branch
          %251 = sbr.rel (%p249) target = $region48
        $region47: #{tpu_custom_call.1} parent=35 // pred_region
          %253 = dma.done [#allocation6], 1024
        $region48: #{tpu_custom_call.1} parent=35 // pred_fallthru
          _
        %s254 = sand.u32 %s32, 1
        %s255 = scalar_lea.sflag [#allocation3], %s254
        %s256 = sand.u32 %s32, 1
        %s257 = smul.addr %s256, 32
        %s258 = scalar_lea.vmem [#allocation2], %s257
        %p259 = pneg %p45
        %p260 = pneg %p42
        %s261 = sand.u32 %s24, 1
        %s262 = scalar_lea.sflag [#allocation6], %s261
        %s263 = sand.u32 %s60, 1
        %s264 = smul.addr %s263, 32
        %s265 = scalar_lea.vmem [#allocation5], %s264
        %p266 = pneg %p73
        %p267 = pneg %p70
        %p268 = pneg %p94
        %p269 = pneg %p91
        %p270 = pneg %p115
        %p271 = pneg %p112
        %p272 = pneg %p141
        %p273 = pneg %p138
        %s274 = sand.u32 %s128, 1
        %s275 = scalar_lea.sflag [#allocation4], %s274
        %s276 = sand.u32 %s128, 1
        %s277 = smul.addr %s276, 64
        %s278 = scalar_lea.vmem [#allocation8], %s277
        %s279 = smul.u32 4, %s24
        %s280 = sadd.s32 %s24, 1
        %s281 = smul.u32 4, %s280
        %s282 = smul.u32 4, %s24
        %v284 = vld [vmem:[%s233] sm:$0xff]
        %v285 = vld [vmem:[%s233 + $0x8] sm:$0xff]
        %v286 = vld [vmem:[%s233 + $0x10] sm:$0xff]
        %v287 = vld [vmem:[%s233 + $0x18] sm:$0xff]
        %v288 = vld [vmem:[%s243] sm:$0xff]
        %v289 = vld [vmem:[%s243 + $0x10] sm:$0xff]
        %v294 = vunpack.c.l.b16 %v284
        %v295 = vunpack.c.h.b16 %v284
        %v296 = vunpack.c.l.b16 %v285
        %v297 = vunpack.c.h.b16 %v285
        %v298 = vunpack.c.l.b16 %v286
        %v299 = vunpack.c.h.b16 %v286
        %v300 = vunpack.c.l.b16 %v287
        %v301 = vunpack.c.h.b16 %v287
        %v302 = vpack.c.b16 %v298, %v294
        %v303 = vpack.c.b16 %v299, %v295
        %v304 = vpack.c.b16 %v300, %v296
        %v305 = vpack.c.b16 %v301, %v297
        %v312 = vunpack.c.l.b16 %v288
        %v313 = vunpack.c.h.b16 %v288
        %v314 = vunpack.c.l.b16 %v289
        %v315 = vunpack.c.h.b16 %v289
        %v316 = vpack.c.b16 %v314, %v312
        %v317 = vpack.c.b16 %v315, %v313
        %318 = vrot.lane.b32.xlu0 %v302, 127
        %v319 = vpop.permute.xlu0 %318
        %320 = vrot.lane.b32.xlu0 %v303, 127
        %v321 = vpop.permute.xlu0 %320
        %322 = vrot.lane.b32.xlu0 %v304, 127
        %v323 = vpop.permute.xlu0 %322
        %324 = vrot.lane.b32.xlu0 %v305, 127
        %v325 = vpop.permute.xlu0 %324
        %326 = vrot.lane.b32.xlu0 %v316, 127
        %v327 = vpop.permute.xlu0 %326
        %vm328 = vcmask 1039360
        %v329 = vsel %vm328, %v319, %v321
        %v330 = vsel %vm328, %v321, %v323
        %v331 = vsel %vm328, %v323, %v325
        %v332 = vsel %vm328, %v325, %v327
        %337 = vrot.lane.b32.xlu0 %v302, 126
        %v338 = vpop.permute.xlu0 %337
        %339 = vrot.lane.b32.xlu0 %v303, 126
        %v340 = vpop.permute.xlu0 %339
        %341 = vrot.lane.b32.xlu0 %v304, 126
        %v342 = vpop.permute.xlu0 %341
        %343 = vrot.lane.b32.xlu0 %v305, 126
        %v344 = vpop.permute.xlu0 %343
        %345 = vrot.lane.b32.xlu0 %v316, 126
        %v346 = vpop.permute.xlu0 %345
        %vm347 = vcmask 1031168
        %v348 = vsel %vm347, %v338, %v340
        %v349 = vsel %vm347, %v340, %v342
        %v350 = vsel %vm347, %v342, %v344
        %v351 = vsel %vm347, %v344, %v346
        %356 = vrot.lane.b32.xlu0 %v302, 118
        %v357 = vpop.permute.xlu0 %356
        %358 = vrot.lane.b32.xlu0 %v303, 118
        %v359 = vpop.permute.xlu0 %358
        %360 = vrot.lane.b32.xlu0 %v304, 118
        %v361 = vpop.permute.xlu0 %360
        %362 = vrot.lane.b32.xlu0 %v305, 118
        %v363 = vpop.permute.xlu0 %362
        %364 = vrot.lane.b32.xlu0 %v316, 118
        %v365 = vpop.permute.xlu0 %364
        %vm366 = vcmask 965632
        %v367 = vsel %vm366, %v357, %v359
        %v368 = vsel %vm366, %v359, %v361
        %v369 = vsel %vm366, %v361, %v363
        %v370 = vsel %vm366, %v363, %v365
        %375 = vrot.lane.b32.xlu0 %v302, 117
        %v376 = vpop.permute.xlu0 %375
        %377 = vrot.lane.b32.xlu0 %v303, 117
        %v378 = vpop.permute.xlu0 %377
        %379 = vrot.lane.b32.xlu0 %v304, 117
        %v380 = vpop.permute.xlu0 %379
        %381 = vrot.lane.b32.xlu0 %v305, 117
        %v382 = vpop.permute.xlu0 %381
        %383 = vrot.lane.b32.xlu0 %v316, 117
        %v384 = vpop.permute.xlu0 %383
        %vm385 = vcmask 957440
        %v386 = vsel %vm385, %v376, %v378
        %v387 = vsel %vm385, %v378, %v380
        %v388 = vsel %vm385, %v380, %v382
        %v389 = vsel %vm385, %v382, %v384
        %394 = vrot.lane.b32.xlu0 %v302, 116
        %v395 = vpop.permute.xlu0 %394
        %396 = vrot.lane.b32.xlu0 %v303, 116
        %v397 = vpop.permute.xlu0 %396
        %398 = vrot.lane.b32.xlu0 %v304, 116
        %v399 = vpop.permute.xlu0 %398
        %400 = vrot.lane.b32.xlu0 %v305, 116
        %v401 = vpop.permute.xlu0 %400
        %402 = vrot.lane.b32.xlu0 %v316, 116
        %v403 = vpop.permute.xlu0 %402
        %vm404 = vcmask 949248
        %v405 = vsel %vm404, %v395, %v397
        %v406 = vsel %vm404, %v397, %v399
        %v407 = vsel %vm404, %v399, %v401
        %v408 = vsel %vm404, %v401, %v403
        %413 = vrot.lane.b32.xlu0 %v302, 108
        %v414 = vpop.permute.xlu0 %413
        %415 = vrot.lane.b32.xlu0 %v303, 108
        %v416 = vpop.permute.xlu0 %415
        %417 = vrot.lane.b32.xlu0 %v304, 108
        %v418 = vpop.permute.xlu0 %417
        %419 = vrot.lane.b32.xlu0 %v305, 108
        %v420 = vpop.permute.xlu0 %419
        %421 = vrot.lane.b32.xlu0 %v316, 108
        %v422 = vpop.permute.xlu0 %421
        %vm423 = vcmask 883712
        %v424 = vsel %vm423, %v414, %v416
        %v425 = vsel %vm423, %v416, %v418
        %v426 = vsel %vm423, %v418, %v420
        %v427 = vsel %vm423, %v420, %v422
        %432 = vrot.lane.b32.xlu0 %v302, 107
        %v433 = vpop.permute.xlu0 %432
        %434 = vrot.lane.b32.xlu0 %v303, 107
        %v435 = vpop.permute.xlu0 %434
        %436 = vrot.lane.b32.xlu0 %v304, 107
        %v437 = vpop.permute.xlu0 %436
        %438 = vrot.lane.b32.xlu0 %v305, 107
        %v439 = vpop.permute.xlu0 %438
        %440 = vrot.lane.b32.xlu0 %v316, 107
        %v441 = vpop.permute.xlu0 %440
        %vm442 = vcmask 875520
        %v443 = vsel %vm442, %v433, %v435
        %v444 = vsel %vm442, %v435, %v437
        %v445 = vsel %vm442, %v437, %v439
        %v446 = vsel %vm442, %v439, %v441
        %451 = vrot.lane.b32.xlu0 %v302, 106
        %v452 = vpop.permute.xlu0 %451
        %453 = vrot.lane.b32.xlu0 %v303, 106
        %v454 = vpop.permute.xlu0 %453
        %455 = vrot.lane.b32.xlu0 %v304, 106
        %v456 = vpop.permute.xlu0 %455
        %457 = vrot.lane.b32.xlu0 %v305, 106
        %v458 = vpop.permute.xlu0 %457
        %459 = vrot.lane.b32.xlu0 %v316, 106
        %v460 = vpop.permute.xlu0 %459
        %vm461 = vcmask 867328
        %v462 = vsel %vm461, %v452, %v454
        %v463 = vsel %vm461, %v454, %v456
        %v464 = vsel %vm461, %v456, %v458
        %v465 = vsel %vm461, %v458, %v460
        %470 = vrot.lane.b32.xlu0 %v302, 28
        %v471 = vpop.permute.xlu0 %470
        %472 = vrot.lane.b32.xlu0 %v303, 28
        %v473 = vpop.permute.xlu0 %472
        %474 = vrot.lane.b32.xlu0 %v304, 28
        %v475 = vpop.permute.xlu0 %474
        %476 = vrot.lane.b32.xlu0 %v305, 28
        %v477 = vpop.permute.xlu0 %476
        %478 = vrot.lane.b32.xlu0 %v316, 28
        %v479 = vpop.permute.xlu0 %478
        %vm480 = vcmask 228352
        %v481 = vsel %vm480, %v471, %v473
        %v482 = vsel %vm480, %v473, %v475
        %v483 = vsel %vm480, %v475, %v477
        %v484 = vsel %vm480, %v477, %v479
        %489 = vrot.lane.b32.xlu0 %v302, 27
        %v490 = vpop.permute.xlu0 %489
        %491 = vrot.lane.b32.xlu0 %v303, 27
        %v492 = vpop.permute.xlu0 %491
        %493 = vrot.lane.b32.xlu0 %v304, 27
        %v494 = vpop.permute.xlu0 %493
        %495 = vrot.lane.b32.xlu0 %v305, 27
        %v496 = vpop.permute.xlu0 %495
        %497 = vrot.lane.b32.xlu0 %v316, 27
        %v498 = vpop.permute.xlu0 %497
        %vm499 = vcmask 220160
        %v500 = vsel %vm499, %v490, %v492
        %v501 = vsel %vm499, %v492, %v494
        %v502 = vsel %vm499, %v494, %v496
        %v503 = vsel %vm499, %v496, %v498
        %508 = vrot.lane.b32.xlu0 %v302, 26
        %v509 = vpop.permute.xlu0 %508
        %510 = vrot.lane.b32.xlu0 %v303, 26
        %v511 = vpop.permute.xlu0 %510
        %512 = vrot.lane.b32.xlu0 %v304, 26
        %v513 = vpop.permute.xlu0 %512
        %514 = vrot.lane.b32.xlu0 %v305, 26
        %v515 = vpop.permute.xlu0 %514
        %516 = vrot.lane.b32.xlu0 %v316, 26
        %v517 = vpop.permute.xlu0 %516
        %vm518 = vcmask 211968
        %v519 = vsel %vm518, %v509, %v511
        %v520 = vsel %vm518, %v511, %v513
        %v521 = vsel %vm518, %v513, %v515
        %v522 = vsel %vm518, %v515, %v517
        %527 = vrot.lane.b32.xlu0 %v302, 18
        %v528 = vpop.permute.xlu0 %527
        %529 = vrot.lane.b32.xlu0 %v303, 18
        %v530 = vpop.permute.xlu0 %529
        %531 = vrot.lane.b32.xlu0 %v304, 18
        %v532 = vpop.permute.xlu0 %531
        %533 = vrot.lane.b32.xlu0 %v305, 18
        %v534 = vpop.permute.xlu0 %533
        %535 = vrot.lane.b32.xlu0 %v316, 18
        %v536 = vpop.permute.xlu0 %535
        %vm537 = vcmask 146432
        %v538 = vsel %vm537, %v528, %v530
        %v539 = vsel %vm537, %v530, %v532
        %v540 = vsel %vm537, %v532, %v534
        %v541 = vsel %vm537, %v534, %v536
        %546 = vrot.lane.b32.xlu0 %v302, 17
        %v547 = vpop.permute.xlu0 %546
        %548 = vrot.lane.b32.xlu0 %v303, 17
        %v549 = vpop.permute.xlu0 %548
        %550 = vrot.lane.b32.xlu0 %v304, 17
        %v551 = vpop.permute.xlu0 %550
        %552 = vrot.lane.b32.xlu0 %v305, 17
        %v553 = vpop.permute.xlu0 %552
        %554 = vrot.lane.b32.xlu0 %v316, 17
        %v555 = vpop.permute.xlu0 %554
        %vm556 = vcmask 138240
        %v557 = vsel %vm556, %v547, %v549
        %v558 = vsel %vm556, %v549, %v551
        %v559 = vsel %vm556, %v551, %v553
        %v560 = vsel %vm556, %v553, %v555
        %565 = vrot.lane.b32.xlu0 %v302, 16
        %v566 = vpop.permute.xlu0 %565
        %567 = vrot.lane.b32.xlu0 %v303, 16
        %v568 = vpop.permute.xlu0 %567
        %569 = vrot.lane.b32.xlu0 %v304, 16
        %v570 = vpop.permute.xlu0 %569
        %571 = vrot.lane.b32.xlu0 %v305, 16
        %v572 = vpop.permute.xlu0 %571
        %573 = vrot.lane.b32.xlu0 %v316, 16
        %v574 = vpop.permute.xlu0 %573
        %vm575 = vcmask 130048
        %v576 = vsel %vm575, %v566, %v568
        %v577 = vsel %vm575, %v568, %v570
        %v578 = vsel %vm575, %v570, %v572
        %v579 = vsel %vm575, %v572, %v574
        %584 = vrot.lane.b32.xlu0 %v302, 8
        %v585 = vpop.permute.xlu0 %584
        %586 = vrot.lane.b32.xlu0 %v303, 8
        %v587 = vpop.permute.xlu0 %586
        %588 = vrot.lane.b32.xlu0 %v304, 8
        %v589 = vpop.permute.xlu0 %588
        %590 = vrot.lane.b32.xlu0 %v305, 8
        %v591 = vpop.permute.xlu0 %590
        %592 = vrot.lane.b32.xlu0 %v316, 8
        %v593 = vpop.permute.xlu0 %592
        %vm594 = vcmask 64512
        %v595 = vsel %vm594, %v585, %v587
        %v596 = vsel %vm594, %v587, %v589
        %v597 = vsel %vm594, %v589, %v591
        %v598 = vsel %vm594, %v591, %v593
        %603 = vrot.lane.b32.xlu0 %v303, 49
        %v604 = vpop.permute.xlu0 %603
        %605 = vrot.lane.b32.xlu0 %v304, 49
        %v606 = vpop.permute.xlu0 %605
        %607 = vrot.lane.b32.xlu0 %v305, 49
        %v608 = vpop.permute.xlu0 %607
        %609 = vrot.lane.b32.xlu0 %v316, 49
        %v610 = vpop.permute.xlu0 %609
        %611 = vrot.lane.b32.xlu0 %v317, 49
        %v612 = vpop.permute.xlu0 %611
        %vm613 = vcmask 400384
        %v614 = vsel %vm613, %v604, %v606
        %v615 = vsel %vm613, %v606, %v608
        %v616 = vsel %vm613, %v608, %v610
        %v617 = vsel %vm613, %v610, %v612
        %618 = vrot.lane.b32.xlu0 %v303, 48
        %v619 = vpop.permute.xlu0 %618
        %620 = vrot.lane.b32.xlu0 %v304, 48
        %v621 = vpop.permute.xlu0 %620
        %622 = vrot.lane.b32.xlu0 %v305, 48
        %v623 = vpop.permute.xlu0 %622
        %624 = vrot.lane.b32.xlu0 %v316, 48
        %v625 = vpop.permute.xlu0 %624
        %626 = vrot.lane.b32.xlu0 %v317, 48
        %v627 = vpop.permute.xlu0 %626
        %vm628 = vcmask 392192
        %v629 = vsel %vm628, %v619, %v621
        %v630 = vsel %vm628, %v621, %v623
        %v631 = vsel %vm628, %v623, %v625
        %v632 = vsel %vm628, %v625, %v627
        %633 = vrot.lane.b32.xlu0 %v303, 47
        %v634 = vpop.permute.xlu0 %633
        %635 = vrot.lane.b32.xlu0 %v304, 47
        %v636 = vpop.permute.xlu0 %635
        %637 = vrot.lane.b32.xlu0 %v305, 47
        %v638 = vpop.permute.xlu0 %637
        %639 = vrot.lane.b32.xlu0 %v316, 47
        %v640 = vpop.permute.xlu0 %639
        %641 = vrot.lane.b32.xlu0 %v317, 47
        %v642 = vpop.permute.xlu0 %641
        %vm643 = vcmask 384000
        %v644 = vsel %vm643, %v634, %v636
        %v645 = vsel %vm643, %v636, %v638
        %v646 = vsel %vm643, %v638, %v640
        %v647 = vsel %vm643, %v640, %v642
        %648 = vrot.lane.b32.xlu0 %v303, 39
        %v649 = vpop.permute.xlu0 %648
        %650 = vrot.lane.b32.xlu0 %v304, 39
        %v651 = vpop.permute.xlu0 %650
        %652 = vrot.lane.b32.xlu0 %v305, 39
        %v653 = vpop.permute.xlu0 %652
        %654 = vrot.lane.b32.xlu0 %v316, 39
        %v655 = vpop.permute.xlu0 %654
        %656 = vrot.lane.b32.xlu0 %v317, 39
        %v657 = vpop.permute.xlu0 %656
        %vm658 = vcmask 318464
        %v659 = vsel %vm658, %v649, %v651
        %v660 = vsel %vm658, %v651, %v653
        %v661 = vsel %vm658, %v653, %v655
        %v662 = vsel %vm658, %v655, %v657
        %663 = vrot.lane.b32.xlu0 %v303, 38
        %v664 = vpop.permute.xlu0 %663
        %665 = vrot.lane.b32.xlu0 %v304, 38
        %v666 = vpop.permute.xlu0 %665
        %667 = vrot.lane.b32.xlu0 %v305, 38
        %v668 = vpop.permute.xlu0 %667
        %669 = vrot.lane.b32.xlu0 %v316, 38
        %v670 = vpop.permute.xlu0 %669
        %671 = vrot.lane.b32.xlu0 %v317, 38
        %v672 = vpop.permute.xlu0 %671
        %vm673 = vcmask 310272
        %v674 = vsel %vm673, %v664, %v666
        %v675 = vsel %vm673, %v666, %v668
        %v676 = vsel %vm673, %v668, %v670
        %v677 = vsel %vm673, %v670, %v672
        %678 = vrot.lane.b32.xlu0 %v303, 37
        %v679 = vpop.permute.xlu0 %678
        %680 = vrot.lane.b32.xlu0 %v304, 37
        %v681 = vpop.permute.xlu0 %680
        %682 = vrot.lane.b32.xlu0 %v305, 37
        %v683 = vpop.permute.xlu0 %682
        %684 = vrot.lane.b32.xlu0 %v316, 37
        %v685 = vpop.permute.xlu0 %684
        %686 = vrot.lane.b32.xlu0 %v317, 37
        %v687 = vpop.permute.xlu0 %686
        %vm688 = vcmask 302080
        %v689 = vsel %vm688, %v679, %v681
        %v690 = vsel %vm688, %v681, %v683
        %v691 = vsel %vm688, %v683, %v685
        %v692 = vsel %vm688, %v685, %v687
        %693 = vrot.lane.b32.xlu0 %v303, 29
        %v694 = vpop.permute.xlu0 %693
        %695 = vrot.lane.b32.xlu0 %v304, 29
        %v696 = vpop.permute.xlu0 %695
        %697 = vrot.lane.b32.xlu0 %v305, 29
        %v698 = vpop.permute.xlu0 %697
        %699 = vrot.lane.b32.xlu0 %v316, 29
        %v700 = vpop.permute.xlu0 %699
        %701 = vrot.lane.b32.xlu0 %v317, 29
        %v702 = vpop.permute.xlu0 %701
        %vm703 = vcmask 236544
        %v704 = vsel %vm703, %v694, %v696
        %v705 = vsel %vm703, %v696, %v698
        %v706 = vsel %vm703, %v698, %v700
        %v707 = vsel %vm703, %v700, %v702
        %708 = vrot.lane.b32.xlu0 %v317, 28
        %v709 = vpop.permute.xlu0 %708
        %v710 = vsel %vm480, %v479, %v709
        %711 = vrot.lane.b32.xlu0 %v317, 27
        %v712 = vpop.permute.xlu0 %711
        %v713 = vsel %vm499, %v498, %v712
        %714 = vrot.lane.b32.xlu0 %v302, 7
        %v715 = vpop.permute.xlu0 %714
        %716 = vrot.lane.b32.xlu0 %v303, 7
        %v717 = vpop.permute.xlu0 %716
        %718 = vrot.lane.b32.xlu0 %v304, 7
        %v719 = vpop.permute.xlu0 %718
        %720 = vrot.lane.b32.xlu0 %v305, 7
        %v721 = vpop.permute.xlu0 %720
        %722 = vrot.lane.b32.xlu0 %v316, 7
        %v723 = vpop.permute.xlu0 %722
        %724 = vrot.lane.b32.xlu0 %v329, 7
        %v725 = vpop.permute.xlu0 %724
        %726 = vrot.lane.b32.xlu0 %v330, 7
        %v727 = vpop.permute.xlu0 %726
        %728 = vrot.lane.b32.xlu0 %v331, 7
        %v729 = vpop.permute.xlu0 %728
        %730 = vrot.lane.b32.xlu0 %v332, 7
        %v731 = vpop.permute.xlu0 %730
        %732 = vrot.lane.b32.xlu0 %v327, 7
        %v733 = vpop.permute.xlu0 %732
        %734 = vrot.lane.b32.xlu0 %v604, 7
        %v735 = vpop.permute.xlu0 %734
        %736 = vrot.lane.b32.xlu0 %v614, 7
        %v737 = vpop.permute.xlu0 %736
        %738 = vrot.lane.b32.xlu0 %v615, 7
        %v739 = vpop.permute.xlu0 %738
        %740 = vrot.lane.b32.xlu0 %v616, 7
        %v741 = vpop.permute.xlu0 %740
        %742 = vrot.lane.b32.xlu0 %v617, 7
        %v743 = vpop.permute.xlu0 %742
        %744 = vrot.lane.b32.xlu0 %v619, 7
        %v745 = vpop.permute.xlu0 %744
        %746 = vrot.lane.b32.xlu0 %v629, 7
        %v747 = vpop.permute.xlu0 %746
        %748 = vrot.lane.b32.xlu0 %v630, 7
        %v749 = vpop.permute.xlu0 %748
        %750 = vrot.lane.b32.xlu0 %v631, 7
        %v751 = vpop.permute.xlu0 %750
        %752 = vrot.lane.b32.xlu0 %v632, 7
        %v753 = vpop.permute.xlu0 %752
        %754 = vrot.lane.b32.xlu0 %v634, 7
        %v755 = vpop.permute.xlu0 %754
        %756 = vrot.lane.b32.xlu0 %v644, 7
        %v757 = vpop.permute.xlu0 %756
        %758 = vrot.lane.b32.xlu0 %v645, 7
        %v759 = vpop.permute.xlu0 %758
        %760 = vrot.lane.b32.xlu0 %v646, 7
        %v761 = vpop.permute.xlu0 %760
        %762 = vrot.lane.b32.xlu0 %v647, 7
        %v763 = vpop.permute.xlu0 %762
        %764 = vrot.lane.b32.xlu0 %v649, 7
        %v765 = vpop.permute.xlu0 %764
        %766 = vrot.lane.b32.xlu0 %v659, 7
        %v767 = vpop.permute.xlu0 %766
        %768 = vrot.lane.b32.xlu0 %v660, 7
        %v769 = vpop.permute.xlu0 %768
        %770 = vrot.lane.b32.xlu0 %v661, 7
        %v771 = vpop.permute.xlu0 %770
        %772 = vrot.lane.b32.xlu0 %v662, 7
        %v773 = vpop.permute.xlu0 %772
        %774 = vrot.lane.b32.xlu0 %v664, 7
        %v775 = vpop.permute.xlu0 %774
        %776 = vrot.lane.b32.xlu0 %v674, 7
        %v777 = vpop.permute.xlu0 %776
        %778 = vrot.lane.b32.xlu0 %v675, 7
        %v779 = vpop.permute.xlu0 %778
        %780 = vrot.lane.b32.xlu0 %v676, 7
        %v781 = vpop.permute.xlu0 %780
        %782 = vrot.lane.b32.xlu0 %v677, 7
        %v783 = vpop.permute.xlu0 %782
        %784 = vrot.lane.b32.xlu0 %v679, 7
        %v785 = vpop.permute.xlu0 %784
        %786 = vrot.lane.b32.xlu0 %v689, 7
        %v787 = vpop.permute.xlu0 %786
        %788 = vrot.lane.b32.xlu0 %v690, 7
        %v789 = vpop.permute.xlu0 %788
        %790 = vrot.lane.b32.xlu0 %v691, 7
        %v791 = vpop.permute.xlu0 %790
        %792 = vrot.lane.b32.xlu0 %v692, 7
        %v793 = vpop.permute.xlu0 %792
        %794 = vrot.lane.b32.xlu0 %v694, 7
        %v795 = vpop.permute.xlu0 %794
        %796 = vrot.lane.b32.xlu0 %v704, 7
        %v797 = vpop.permute.xlu0 %796
        %798 = vrot.lane.b32.xlu0 %v705, 7
        %v799 = vpop.permute.xlu0 %798
        %800 = vrot.lane.b32.xlu0 %v706, 7
        %v801 = vpop.permute.xlu0 %800
        %802 = vrot.lane.b32.xlu0 %v707, 7
        %v803 = vpop.permute.xlu0 %802
        %804 = vrot.lane.b32.xlu0 %v473, 7
        %v805 = vpop.permute.xlu0 %804
        %806 = vrot.lane.b32.xlu0 %v482, 7
        %v807 = vpop.permute.xlu0 %806
        %808 = vrot.lane.b32.xlu0 %v483, 7
        %v809 = vpop.permute.xlu0 %808
        %810 = vrot.lane.b32.xlu0 %v484, 7
        %v811 = vpop.permute.xlu0 %810
        %812 = vrot.lane.b32.xlu0 %v710, 7
        %v813 = vpop.permute.xlu0 %812
        %814 = vrot.lane.b32.xlu0 %v492, 7
        %v815 = vpop.permute.xlu0 %814
        %816 = vrot.lane.b32.xlu0 %v501, 7
        %v817 = vpop.permute.xlu0 %816
        %818 = vrot.lane.b32.xlu0 %v502, 7
        %v819 = vpop.permute.xlu0 %818
        %820 = vrot.lane.b32.xlu0 %v503, 7
        %v821 = vpop.permute.xlu0 %820
        %822 = vrot.lane.b32.xlu0 %v713, 7
        %v823 = vpop.permute.xlu0 %822
        %vm824 = vcmask 56320
        %v825 = vsel %vm824, %v715, %v717
        %v826 = vsel %vm824, %v717, %v719
        %v827 = vsel %vm824, %v719, %v721
        %v828 = vsel %vm824, %v721, %v723
        %v829 = vsel %vm824, %v725, %v727
        %v830 = vsel %vm824, %v727, %v729
        %v831 = vsel %vm824, %v729, %v731
        %v832 = vsel %vm824, %v731, %v733
        %v833 = vsel %vm824, %v735, %v737
        %v834 = vsel %vm824, %v737, %v739
        %v835 = vsel %vm824, %v739, %v741
        %v836 = vsel %vm824, %v741, %v743
        %v837 = vsel %vm824, %v745, %v747
        %v838 = vsel %vm824, %v747, %v749
        %v839 = vsel %vm824, %v749, %v751
        %v840 = vsel %vm824, %v751, %v753
        %v841 = vsel %vm824, %v755, %v757
        %v842 = vsel %vm824, %v757, %v759
        %v843 = vsel %vm824, %v759, %v761
        %v844 = vsel %vm824, %v761, %v763
        %v845 = vsel %vm824, %v765, %v767
        %v846 = vsel %vm824, %v767, %v769
        %v847 = vsel %vm824, %v769, %v771
        %v848 = vsel %vm824, %v771, %v773
        %v849 = vsel %vm824, %v775, %v777
        %v850 = vsel %vm824, %v777, %v779
        %v851 = vsel %vm824, %v779, %v781
        %v852 = vsel %vm824, %v781, %v783
        %v853 = vsel %vm824, %v785, %v787
        %v854 = vsel %vm824, %v787, %v789
        %v855 = vsel %vm824, %v789, %v791
        %v856 = vsel %vm824, %v791, %v793
        %v857 = vsel %vm824, %v795, %v797
        %v858 = vsel %vm824, %v797, %v799
        %v859 = vsel %vm824, %v799, %v801
        %v860 = vsel %vm824, %v801, %v803
        %v861 = vsel %vm824, %v805, %v807
        %v862 = vsel %vm824, %v807, %v809
        %v863 = vsel %vm824, %v809, %v811
        %v864 = vsel %vm824, %v811, %v813
        %v865 = vsel %vm824, %v815, %v817
        %v866 = vsel %vm824, %v817, %v819
        %v867 = vsel %vm824, %v819, %v821
        %v868 = vsel %vm824, %v821, %v823
        %v913 = vld [vmem:[#allocation7] sm:$0xff]
        %v914 = vld [vmem:[#allocation7 + $0x8] sm:$0xff]
        %v915 = vld [vmem:[#allocation7 + $0x10] sm:$0xff]
        %v916 = vld [vmem:[#allocation7 + $0x18] sm:$0xff]
        %v917 = vld [vmem:[#allocation7 + $0x20] sm:$0xff]
        %v918 = vld [vmem:[#allocation7 + $0x28] sm:$0xff]
        %v919 = vld [vmem:[#allocation7 + $0x30] sm:$0xff]
        %v920 = vld [vmem:[#allocation7 + $0x38] sm:$0xff]
        %v921 = vld [vmem:[%s3] sm:$0xff]
        %v922 = vld [vmem:[%s3 + $0x8] sm:$0xff]
        %v923 = vld [vmem:[%s3 + $0x10] sm:$0xff]
        %v924 = vld [vmem:[%s3 + $0x18] sm:$0xff]
        %926 = vset.pattern.permute.xlu0 0
        %927 = vperm.xlu0 %926, %v921
        %v928 = vpop.permute.xlu0 %927
        %931 = vset.pattern.permute.xlu0 0
        %932 = vperm.xlu0 %931, %v922
        %v933 = vpop.permute.xlu0 %932
        %936 = vset.pattern.permute.xlu0 0
        %937 = vperm.xlu0 %936, %v923
        %v938 = vpop.permute.xlu0 %937
        %941 = vset.pattern.permute.xlu0 0
        %942 = vperm.xlu0 %941, %v924
        %v943 = vpop.permute.xlu0 %942
        %v953 = vunpack.c.l.b16 %v913
        %v954 = vunpack.c.h.b16 %v913
        %v955 = vunpack.c.l.b16 %v914
        %v956 = vunpack.c.h.b16 %v914
        %v957 = vunpack.c.l.b16 %v915
        %v958 = vunpack.c.h.b16 %v915
        %v959 = vunpack.c.l.b16 %v916
        %v960 = vunpack.c.h.b16 %v916
        %v961 = vunpack.c.l.b16 %v917
        %v962 = vunpack.c.h.b16 %v917
        %v963 = vunpack.c.l.b16 %v918
        %v964 = vunpack.c.h.b16 %v918
        %v965 = vunpack.c.l.b16 %v919
        %v966 = vunpack.c.h.b16 %v919
        %v967 = vunpack.c.l.b16 %v920
        %v968 = vunpack.c.h.b16 %v920
        %v969 = vpack.c.b16 %v957, %v953
        %v970 = vpack.c.b16 %v958, %v954
        %v971 = vpack.c.b16 %v959, %v955
        %v972 = vpack.c.b16 %v960, %v956
        %v973 = vpack.c.b16 %v965, %v961
        %v974 = vpack.c.b16 %v966, %v962
        %v975 = vpack.c.b16 %v967, %v963
        %v976 = vpack.c.b16 %v968, %v964
        %vm983 = vcmask 392192
        %v985 = vsel %vm983, %v972, 0
        %v988 = vsel %vm983, %v976, 0
        %990 = vmatpush.bf16.msra.mxu0 %v443
        %991 = vmatpush.bf16.msra.mxu0 %v424
        %992 = vmatpush.bf16.msra.mxu0 %v405
        %993 = vmatpush.bf16.msra.mxu0 %v386
        %994 = vmatpush.bf16.msra.mxu0 %v367
        %995 = vmatpush.bf16.msra.mxu0 %v348
        %996 = vmatpush.bf16.msra.mxu0 %v329
        %997 = vmatpush.bf16.msra.mxu0 %v302
        %998 = vmatmul.bf16.gmra.mxu0 %v969
        %v999 = vpop.f32.mrf.mxu0
        %v1000 = vadd.f32 %v928, %v999
        %v1001 = vpop.f32.mrf.mxu0
        %v1002 = vadd.f32 %v933, %v1001
        %1003 = vmatmul.bf16.gmra.mxu0 %v973
        %v1004 = vpop.f32.mrf.mxu0
        %v1005 = vadd.f32 %v938, %v1004
        %v1006 = vpop.f32.mrf.mxu0
        %v1007 = vadd.f32 %v943, %v1006
        %1008 = vdwg.mxu0
        %1009 = vmatpush.bf16.msra.mxu0 %v595
        %1010 = vmatpush.bf16.msra.mxu0 %v576
        %1011 = vmatpush.bf16.msra.mxu0 %v557
        %1012 = vmatpush.bf16.msra.mxu0 %v538
        %1013 = vmatpush.bf16.msra.mxu0 %v519
        %1014 = vmatpush.bf16.msra.mxu0 %v500
        %1015 = vmatpush.bf16.msra.mxu0 %v481
        %1016 = vmatpush.bf16.msra.mxu0 %v462
        %1017 = vmatmul.bf16.gmra.mxu0 %v970
        %v1018 = vpop.f32.mrf.mxu0
        %v1019 = vadd.f32 %v1000, %v1018
        %v1020 = vpop.f32.mrf.mxu0
        %v1021 = vadd.f32 %v1002, %v1020
        %1022 = vmatmul.bf16.gmra.mxu0 %v974
        %v1023 = vpop.f32.mrf.mxu0
        %v1024 = vadd.f32 %v1005, %v1023
        %v1025 = vpop.f32.mrf.mxu0
        %v1026 = vadd.f32 %v1007, %v1025
        %1027 = vdwg.mxu0
        %1028 = vmatpush.bf16.msra.mxu0 %v853
        %1029 = vmatpush.bf16.msra.mxu0 %v849
        %1030 = vmatpush.bf16.msra.mxu0 %v845
        %1031 = vmatpush.bf16.msra.mxu0 %v841
        %1032 = vmatpush.bf16.msra.mxu0 %v837
        %1033 = vmatpush.bf16.msra.mxu0 %v833
        %1034 = vmatpush.bf16.msra.mxu0 %v829
        %1035 = vmatpush.bf16.msra.mxu0 %v825
        %1036 = vmatmul.bf16.gmra.mxu0 %v971
        %v1037 = vpop.f32.mrf.mxu0
        %v1038 = vadd.f32 %v1019, %v1037
        %v1039 = vpop.f32.mrf.mxu0
        %v1040 = vadd.f32 %v1021, %v1039
        %1041 = vmatmul.bf16.gmra.mxu0 %v975
        %v1042 = vpop.f32.mrf.mxu0
        %v1043 = vadd.f32 %v1024, %v1042
        %v1044 = vpop.f32.mrf.mxu0
        %v1045 = vadd.f32 %v1026, %v1044
        %1046 = vdwg.mxu0
        %1047 = vmatpush.bf16.msra.mxu0 0
        %1048 = vmatpush.bf16.msra.mxu0 0
        %1049 = vmatpush.bf16.msra.mxu0 0
        %1050 = vmatpush.bf16.msra.mxu0 0
        %1051 = vmatpush.bf16.msra.mxu0 0
        %1052 = vmatpush.bf16.msra.mxu0 %v865
        %1053 = vmatpush.bf16.msra.mxu0 %v861
        %1054 = vmatpush.bf16.msra.mxu0 %v857
        %1055 = vmatmul.bf16.gmra.mxu0 %v985
        %v1056 = vpop.f32.mrf.mxu0
        %v1057 = vadd.f32 %v1038, %v1056
        %v1058 = vpop.f32.mrf.mxu0
        %v1059 = vadd.f32 %v1040, %v1058
        %1060 = vmatmul.bf16.gmra.mxu0 %v988
        %v1061 = vpop.f32.mrf.mxu0
        %v1062 = vadd.f32 %v1043, %v1061
        %v1063 = vpop.f32.mrf.mxu0
        %v1064 = vadd.f32 %v1045, %v1063
        %1065 = vdwg.mxu0
        %1066 = vmatpush.bf16.msra.mxu0 %v444
        %1067 = vmatpush.bf16.msra.mxu0 %v425
        %1068 = vmatpush.bf16.msra.mxu0 %v406
        %1069 = vmatpush.bf16.msra.mxu0 %v387
        %1070 = vmatpush.bf16.msra.mxu0 %v368
        %1071 = vmatpush.bf16.msra.mxu0 %v349
        %1072 = vmatpush.bf16.msra.mxu0 %v330
        %1073 = vmatpush.bf16.msra.mxu0 %v303
        %1074 = vmatmul.bf16.gmra.mxu0 %v969
        %v1075 = vpop.f32.mrf.mxu0
        %v1076 = vadd.f32 %v928, %v1075
        %v1077 = vpop.f32.mrf.mxu0
        %v1078 = vadd.f32 %v933, %v1077
        %1079 = vmatmul.bf16.gmra.mxu0 %v973
        %v1080 = vpop.f32.mrf.mxu0
        %v1081 = vadd.f32 %v938, %v1080
        %v1082 = vpop.f32.mrf.mxu0
        %v1083 = vadd.f32 %v943, %v1082
        %1084 = vdwg.mxu0
        %1085 = vmatpush.bf16.msra.mxu0 %v596
        %1086 = vmatpush.bf16.msra.mxu0 %v577
        %1087 = vmatpush.bf16.msra.mxu0 %v558
        %1088 = vmatpush.bf16.msra.mxu0 %v539
        %1089 = vmatpush.bf16.msra.mxu0 %v520
        %1090 = vmatpush.bf16.msra.mxu0 %v501
        %1091 = vmatpush.bf16.msra.mxu0 %v482
        %1092 = vmatpush.bf16.msra.mxu0 %v463
        %1093 = vmatmul.bf16.gmra.mxu0 %v970
        %v1094 = vpop.f32.mrf.mxu0
        %v1095 = vadd.f32 %v1076, %v1094
        %v1096 = vpop.f32.mrf.mxu0
        %v1097 = vadd.f32 %v1078, %v1096
        %1098 = vmatmul.bf16.gmra.mxu0 %v974
        %v1099 = vpop.f32.mrf.mxu0
        %v1100 = vadd.f32 %v1081, %v1099
        %v1101 = vpop.f32.mrf.mxu0
        %v1102 = vadd.f32 %v1083, %v1101
        %1103 = vdwg.mxu0
        %1104 = vmatpush.bf16.msra.mxu0 %v854
        %1105 = vmatpush.bf16.msra.mxu0 %v850
        %1106 = vmatpush.bf16.msra.mxu0 %v846
        %1107 = vmatpush.bf16.msra.mxu0 %v842
        %1108 = vmatpush.bf16.msra.mxu0 %v838
        %1109 = vmatpush.bf16.msra.mxu0 %v834
        %1110 = vmatpush.bf16.msra.mxu0 %v830
        %1111 = vmatpush.bf16.msra.mxu0 %v826
        %1112 = vmatmul.bf16.gmra.mxu0 %v971
        %v1113 = vpop.f32.mrf.mxu0
        %v1114 = vadd.f32 %v1095, %v1113
        %v1115 = vpop.f32.mrf.mxu0
        %v1116 = vadd.f32 %v1097, %v1115
        %1117 = vmatmul.bf16.gmra.mxu0 %v975
        %v1118 = vpop.f32.mrf.mxu0
        %v1119 = vadd.f32 %v1100, %v1118
        %v1120 = vpop.f32.mrf.mxu0
        %v1121 = vadd.f32 %v1102, %v1120
        %1122 = vdwg.mxu0
        %1123 = vmatpush.bf16.msra.mxu0 0
        %1124 = vmatpush.bf16.msra.mxu0 0
        %1125 = vmatpush.bf16.msra.mxu0 0
        %1126 = vmatpush.bf16.msra.mxu0 0
        %1127 = vmatpush.bf16.msra.mxu0 0
        %1128 = vmatpush.bf16.msra.mxu0 %v866
        %1129 = vmatpush.bf16.msra.mxu0 %v862
        %1130 = vmatpush.bf16.msra.mxu0 %v858
        %1131 = vmatmul.bf16.gmra.mxu0 %v985
        %v1132 = vpop.f32.mrf.mxu0
        %v1133 = vadd.f32 %v1114, %v1132
        %v1134 = vpop.f32.mrf.mxu0
        %v1135 = vadd.f32 %v1116, %v1134
        %1136 = vmatmul.bf16.gmra.mxu0 %v988
        %v1137 = vpop.f32.mrf.mxu0
        %v1138 = vadd.f32 %v1119, %v1137
        %v1139 = vpop.f32.mrf.mxu0
        %v1140 = vadd.f32 %v1121, %v1139
        %1141 = vdwg.mxu0
        %1142 = vmatpush.bf16.msra.mxu0 %v445
        %1143 = vmatpush.bf16.msra.mxu0 %v426
        %1144 = vmatpush.bf16.msra.mxu0 %v407
        %1145 = vmatpush.bf16.msra.mxu0 %v388
        %1146 = vmatpush.bf16.msra.mxu0 %v369
        %1147 = vmatpush.bf16.msra.mxu0 %v350
        %1148 = vmatpush.bf16.msra.mxu0 %v331
        %1149 = vmatpush.bf16.msra.mxu0 %v304
        %1150 = vmatmul.bf16.gmra.mxu0 %v969
        %v1151 = vpop.f32.mrf.mxu0
        %v1152 = vadd.f32 %v928, %v1151
        %v1153 = vpop.f32.mrf.mxu0
        %v1154 = vadd.f32 %v933, %v1153
        %1155 = vmatmul.bf16.gmra.mxu0 %v973
        %v1156 = vpop.f32.mrf.mxu0
        %v1157 = vadd.f32 %v938, %v1156
        %v1158 = vpop.f32.mrf.mxu0
        %v1159 = vadd.f32 %v943, %v1158
        %1160 = vdwg.mxu0
        %1161 = vmatpush.bf16.msra.mxu0 %v597
        %1162 = vmatpush.bf16.msra.mxu0 %v578
        %1163 = vmatpush.bf16.msra.mxu0 %v559
        %1164 = vmatpush.bf16.msra.mxu0 %v540
        %1165 = vmatpush.bf16.msra.mxu0 %v521
        %1166 = vmatpush.bf16.msra.mxu0 %v502
        %1167 = vmatpush.bf16.msra.mxu0 %v483
        %1168 = vmatpush.bf16.msra.mxu0 %v464
        %1169 = vmatmul.bf16.gmra.mxu0 %v970
        %v1170 = vpop.f32.mrf.mxu0
        %v1171 = vadd.f32 %v1152, %v1170
        %v1172 = vpop.f32.mrf.mxu0
        %v1173 = vadd.f32 %v1154, %v1172
        %1174 = vmatmul.bf16.gmra.mxu0 %v974
        %v1175 = vpop.f32.mrf.mxu0
        %v1176 = vadd.f32 %v1157, %v1175
        %v1177 = vpop.f32.mrf.mxu0
        %v1178 = vadd.f32 %v1159, %v1177
        %1179 = vdwg.mxu0
        %1180 = vmatpush.bf16.msra.mxu0 %v855
        %1181 = vmatpush.bf16.msra.mxu0 %v851
        %1182 = vmatpush.bf16.msra.mxu0 %v847
        %1183 = vmatpush.bf16.msra.mxu0 %v843
        %1184 = vmatpush.bf16.msra.mxu0 %v839
        %1185 = vmatpush.bf16.msra.mxu0 %v835
        %1186 = vmatpush.bf16.msra.mxu0 %v831
        %1187 = vmatpush.bf16.msra.mxu0 %v827
        %1188 = vmatmul.bf16.gmra.mxu0 %v971
        %v1189 = vpop.f32.mrf.mxu0
        %v1190 = vadd.f32 %v1171, %v1189
        %v1191 = vpop.f32.mrf.mxu0
        %v1192 = vadd.f32 %v1173, %v1191
        %1193 = vmatmul.bf16.gmra.mxu0 %v975
        %v1194 = vpop.f32.mrf.mxu0
        %v1195 = vadd.f32 %v1176, %v1194
        %v1196 = vpop.f32.mrf.mxu0
        %v1197 = vadd.f32 %v1178, %v1196
        %1198 = vdwg.mxu0
        %1199 = vmatpush.bf16.msra.mxu0 0
        %1200 = vmatpush.bf16.msra.mxu0 0
        %1201 = vmatpush.bf16.msra.mxu0 0
        %1202 = vmatpush.bf16.msra.mxu0 0
        %1203 = vmatpush.bf16.msra.mxu0 0
        %1204 = vmatpush.bf16.msra.mxu0 %v867
        %1205 = vmatpush.bf16.msra.mxu0 %v863
        %1206 = vmatpush.bf16.msra.mxu0 %v859
        %1207 = vmatmul.bf16.gmra.mxu0 %v985
        %v1208 = vpop.f32.mrf.mxu0
        %v1209 = vadd.f32 %v1190, %v1208
        %v1210 = vpop.f32.mrf.mxu0
        %v1211 = vadd.f32 %v1192, %v1210
        %1212 = vmatmul.bf16.gmra.mxu0 %v988
        %v1213 = vpop.f32.mrf.mxu0
        %v1214 = vadd.f32 %v1195, %v1213
        %v1215 = vpop.f32.mrf.mxu0
        %v1216 = vadd.f32 %v1197, %v1215
        %1217 = vdwg.mxu0
        %1218 = vmatpush.bf16.msra.mxu0 %v446
        %1219 = vmatpush.bf16.msra.mxu0 %v427
        %1220 = vmatpush.bf16.msra.mxu0 %v408
        %1221 = vmatpush.bf16.msra.mxu0 %v389
        %1222 = vmatpush.bf16.msra.mxu0 %v370
        %1223 = vmatpush.bf16.msra.mxu0 %v351
        %1224 = vmatpush.bf16.msra.mxu0 %v332
        %1225 = vmatpush.bf16.msra.mxu0 %v305
        %1226 = vmatmul.bf16.gmra.mxu0 %v969
        %v1227 = vpop.f32.mrf.mxu0
        %v1228 = vadd.f32 %v928, %v1227
        %v1229 = vpop.f32.mrf.mxu0
        %v1230 = vadd.f32 %v933, %v1229
        %1231 = vmatmul.bf16.gmra.mxu0 %v973
        %v1232 = vpop.f32.mrf.mxu0
        %v1233 = vadd.f32 %v938, %v1232
        %v1234 = vpop.f32.mrf.mxu0
        %v1235 = vadd.f32 %v943, %v1234
        %1236 = vdwg.mxu0
        %1237 = vmatpush.bf16.msra.mxu0 %v598
        %1238 = vmatpush.bf16.msra.mxu0 %v579
        %1239 = vmatpush.bf16.msra.mxu0 %v560
        %1240 = vmatpush.bf16.msra.mxu0 %v541
        %1241 = vmatpush.bf16.msra.mxu0 %v522
        %1242 = vmatpush.bf16.msra.mxu0 %v503
        %1243 = vmatpush.bf16.msra.mxu0 %v484
        %1244 = vmatpush.bf16.msra.mxu0 %v465
        %1245 = vmatmul.bf16.gmra.mxu0 %v970
        %v1246 = vpop.f32.mrf.mxu0
        %v1247 = vadd.f32 %v1228, %v1246
        %v1248 = vpop.f32.mrf.mxu0
        %v1249 = vadd.f32 %v1230, %v1248
        %1250 = vmatmul.bf16.gmra.mxu0 %v974
        %v1251 = vpop.f32.mrf.mxu0
        %v1252 = vadd.f32 %v1233, %v1251
        %v1253 = vpop.f32.mrf.mxu0
        %v1254 = vadd.f32 %v1235, %v1253
        %1255 = vdwg.mxu0
        %1256 = vmatpush.bf16.msra.mxu0 %v856
        %1257 = vmatpush.bf16.msra.mxu0 %v852
        %1258 = vmatpush.bf16.msra.mxu0 %v848
        %1259 = vmatpush.bf16.msra.mxu0 %v844
        %1260 = vmatpush.bf16.msra.mxu0 %v840
        %1261 = vmatpush.bf16.msra.mxu0 %v836
        %1262 = vmatpush.bf16.msra.mxu0 %v832
        %1263 = vmatpush.bf16.msra.mxu0 %v828
        %1264 = vmatmul.bf16.gmra.mxu0 %v971
        %v1265 = vpop.f32.mrf.mxu0
        %v1266 = vadd.f32 %v1247, %v1265
        %v1267 = vpop.f32.mrf.mxu0
        %v1268 = vadd.f32 %v1249, %v1267
        %1269 = vmatmul.bf16.gmra.mxu0 %v975
        %v1270 = vpop.f32.mrf.mxu0
        %v1271 = vadd.f32 %v1252, %v1270
        %v1272 = vpop.f32.mrf.mxu0
        %v1273 = vadd.f32 %v1254, %v1272
        %1274 = vdwg.mxu0
        %1275 = vmatpush.bf16.msra.mxu0 0
        %1276 = vmatpush.bf16.msra.mxu0 0
        %1277 = vmatpush.bf16.msra.mxu0 0
        %1278 = vmatpush.bf16.msra.mxu0 0
        %1279 = vmatpush.bf16.msra.mxu0 0
        %1280 = vmatpush.bf16.msra.mxu0 %v868
        %1281 = vmatpush.bf16.msra.mxu0 %v864
        %1282 = vmatpush.bf16.msra.mxu0 %v860
        %1283 = vmatmul.bf16.gmra.mxu0 %v985
        %v1284 = vpop.f32.mrf.mxu0
        %v1285 = vadd.f32 %v1266, %v1284
        %v1286 = vpop.f32.mrf.mxu0
        %v1287 = vadd.f32 %v1268, %v1286
        %1288 = vmatmul.bf16.gmra.mxu0 %v988
        %v1289 = vpop.f32.mrf.mxu0
        %v1290 = vadd.f32 %v1271, %v1289
        %v1291 = vpop.f32.mrf.mxu0
        %v1292 = vadd.f32 %v1273, %v1291
        %1293 = vdwg.mxu0
        %v1294 = vmax.f32 %v1057, 0.0
        %v1295 = vmax.f32 %v1133, 0.0
        %v1296 = vmax.f32 %v1209, 0.0
        %v1297 = vmax.f32 %v1285, 0.0
        %v1298 = vmax.f32 %v1059, 0.0
        %v1299 = vmax.f32 %v1135, 0.0
        %v1300 = vmax.f32 %v1211, 0.0
        %v1301 = vmax.f32 %v1287, 0.0
        %v1302 = vmax.f32 %v1062, 0.0
        %v1303 = vmax.f32 %v1138, 0.0
        %v1304 = vmax.f32 %v1214, 0.0
        %v1305 = vmax.f32 %v1290, 0.0
        %v1306 = vmax.f32 %v1064, 0.0
        %v1307 = vmax.f32 %v1140, 0.0
        %v1308 = vmax.f32 %v1216, 0.0
        %v1309 = vmax.f32 %v1292, 0.0
        %v1310 = vpack.c.bf16 %v1295, %v1294
        %v1311 = vpack.c.bf16 %v1297, %v1296
        %v1312 = vpack.c.bf16 %v1299, %v1298
        %v1313 = vpack.c.bf16 %v1301, %v1300
        %v1314 = vpack.c.bf16 %v1303, %v1302
        %v1315 = vpack.c.bf16 %v1305, %v1304
        %v1316 = vpack.c.bf16 %v1307, %v1306
        %v1317 = vpack.c.bf16 %v1309, %v1308
        %1318 = vst [vmem:[%s278] sm:$0xff] %v1310
        %1319 = vst [vmem:[%s278 + $0x8] sm:$0xff] %v1311
        %1320 = vst [vmem:[%s278 + $0x10] sm:$0xff] %v1312
        %1321 = vst [vmem:[%s278 + $0x18] sm:$0xff] %v1313
        %1322 = vst [vmem:[%s278 + $0x20] sm:$0xff] %v1314
        %1323 = vst [vmem:[%s278 + $0x28] sm:$0xff] %v1315
        %1324 = vst [vmem:[%s278 + $0x30] sm:$0xff] %v1316
        %1325 = vst [vmem:[%s278 + $0x38] sm:$0xff] %v1317
        %s1326 = sand.u32 %s128, 1
        %s1327 = scalar_lea.sflag [#allocation4], %s1326
        %s1328 = sand.u32 %s128, 1
        %s1329 = smul.addr %s1328, 64
        %s1330 = scalar_lea.vmem [#allocation8], %s1329
        // Predicated region
        $region49: #{tpu_custom_call.1} parent=35 // pred_check
          %p1331 = pneg %p138
        $region50: #{tpu_custom_call.1} parent=35 // pred_check_branch
          %1333 = sbr.rel (%p1331) target = $region52
        $region51: #{tpu_custom_call.1} parent=35 // pred_region
          %s1334 = smul.u32 4, %s24
          %1336 = vsyncadd %s1327, 0
          %s1337 = smul.addr %s1334, 4
          %s1338 = scalar_lea.hbm %s4, %s1337
          %s1339 = sshll.u32 %s1330, 4
          %s1340 = int_to_ptr.vmem [resolvable:$true] %s1339
          %s1341 = sshll.u32 %s1338, 4
          %s1342 = int_to_ptr.hbm [resolvable:$true] %s1341
          %1347 = dma.vmem_to_hbm [thread:$0]  %s1340, 1024, %s1342, %s1327, 256, 512, 16
        $region52: #{tpu_custom_call.1} parent=35 // pred_fallthru
          _
      $region36: #{tpu_custom_call.1} parent=5 // pred_fallthru
        _
      %p1348 = scmp.le.s32.totalorder 2, %s19
      // Predicated region
      $region53: #{tpu_custom_call.1} parent=5 // pred_check
        %p1349 = pneg %p1348
      $region54: #{tpu_custom_call.1} parent=5 // pred_check_branch
        %1351 = sbr.rel (%p1349) target = $region56
      $region55: #{tpu_custom_call.1} parent=5 // pred_region
        %s1352 = ssub.s32 %s19, 2
        // Predicated region
        $region57: #{tpu_custom_call.1} parent=55 // pred_check
          %p1353 = pneg %p144
        $region58: #{tpu_custom_call.1} parent=55 // pred_check_branch
          %1355 = sbr.rel (%p1353) target = $region60
        $region59: #{tpu_custom_call.1} parent=55 // pred_region
          %s1356 = sand.u32 %s129, 1
          %s1357 = scalar_lea.sflag [#allocation4], %s1356
          %s1358 = sand.u32 %s129, 1
          %s1359 = smul.addr %s1358, 64
          %s1360 = scalar_lea.vmem [#allocation8], %s1359
          %1362 = dma.done %s1357, 1024
        $region60: #{tpu_custom_call.1} parent=55 // pred_fallthru
          _
      $region56: #{tpu_custom_call.1} parent=5 // pred_fallthru
        _
    $region6: #{tpu_custom_call.1} parent=1 // loop_footer
      %s23 = sadd.s32 1, %s19
    $region7: #{tpu_custom_call.1} parent=1 // loop_footer_branch
      %18 = sbr.rel target = $region3
    $region8: #{tpu_custom_call.1} parent=1 // loop_exit
      _
    %1363 = vsyncpa [#allocation3], 1
    %s1364 = scalar_lea.sflag [#allocation3], 1
    %1365 = vsyncpa %s1364, 1
    %1366 = vsyncpa [#allocation6], 1
    %s1367 = scalar_lea.sflag [#allocation6], 1
    %1368 = vsyncpa %s1367, 1
    %1369 = vsyncpa [#allocation4], 1
    %s1370 = scalar_lea.sflag [#allocation4], 1
    %1371 = vsyncpa %s1370, 1

</llo_original>
